<compile_context>
chip_gen: v7x
topology: tpu7x:2x2x1
jax: 0.10.0
libtpu: 0.0.40
codegen_flags: <defaults>
</compile_context>

<pallas_src>
import functools

import numpy as np

import jax
import jax.numpy as jnp
from jax.experimental import pallas as pl
from jax.experimental.pallas import tpu as pltpu


def _round_up(x, m):
    return ((x + m - 1) // m) * m


# ----------------------------------------------------------------------------
# Fused kernel: [conv3x3 + folded-BN + ReLU] x 2, one grid step per image.
# x_ref is the already-upsampled/padded/concatenated input, halo-extended so
# every conv tap is a static in-bounds lane slice.  Np(pad) sits on lanes.
# ----------------------------------------------------------------------------
def _double_conv_kernel(x_ref, mask_ref,
                        w1_ref, s1_ref, b1_ref,
                        w2_ref, s2_ref, b2_ref,
                        o_ref,
                        hext_ref,
                        *, Wp, Npad, ext):
    Cmid = w1_ref.shape[1]
    Cout = w2_ref.shape[1]

    x2d = x_ref.at[0]          # (Cin, Next) Ref view: bf16, halo + zero ring

    # --- conv1: 9 per-tap matmuls accumulated in f32 (no im2col slab) -------
    acc = jnp.zeros((Cmid, Npad), jnp.float32)
    for dy in range(3):
        for dx in range(3):
            t = dy * 3 + dx
            off = ext + (dy - 1) * Wp + (dx - 1)
            acc += jnp.dot(w1_ref[t], x2d[:, off:off + Npad],
                           preferred_element_type=jnp.float32)
    h = jnp.maximum(acc * s1_ref[...] + b1_ref[...], 0.0)
    h = h * mask_ref[...]      # re-zero pad ring + lane tail -> conv2 zero pad

    # --- stage h in VMEM (bf16): zero only the two halo strips --------------
    hext_ref[:, :ext] = jnp.zeros((Cmid, ext), hext_ref.dtype)
    hext_ref[:, ext + Npad:] = jnp.zeros((Cmid, ext), hext_ref.dtype)
    hext_ref[:, ext:ext + Npad] = h.astype(hext_ref.dtype)

    # --- conv2: same pattern; h never leaves VMEM ----------------------------
    acc2 = jnp.zeros((Cout, Npad), jnp.float32)
    for dy in range(3):
        for dx in range(3):
            t = dy * 3 + dx
            off = ext + (dy - 1) * Wp + (dx - 1)
            acc2 += jnp.dot(w2_ref[t], hext_ref[:, off:off + Npad],
                            preferred_element_type=jnp.float32)
    y = jnp.maximum(acc2 * s2_ref[...] + b2_ref[...], 0.0)
    o_ref[0] = y               # lane-dense store; pad columns stripped by caller


# ----------------------------------------------------------------------------
# Trace-time constants.
# ----------------------------------------------------------------------------
def _bilinear_matrix(n_in, n_out):
    """(n_out, n_in) 1-D interp matrix, PyTorch bilinear align_corners=True."""
    U = np.zeros((n_out, n_in), np.float32)
    if n_in == 1:
        U[:, 0] = 1.0
        return U
    src = np.arange(n_out, dtype=np.float64) * (n_in - 1) / (n_out - 1)
    lo = np.clip(np.floor(src).astype(np.int64), 0, n_in - 1)
    hi = np.minimum(lo + 1, n_in - 1)
    frac = src - lo
    U[np.arange(n_out), lo] += (1.0 - frac)
    U[np.arange(n_out), hi] += frac
    return U.astype(np.float32)


def _fold_bn(gamma, beta, mean, var, eps=1e-5):
    scale = gamma / jnp.sqrt(var + eps)
    return scale, beta - mean * scale


# ----------------------------------------------------------------------------
# Wrapper: `Up.forward(x1, x2)`, NCHW in / NCHW out.
# ----------------------------------------------------------------------------
def up_forward(x1, x2, params):
    B, C1, H1, W1 = x1.shape
    _, C2, H2, W2 = x2.shape
    Cin = C1 + C2
    Cmid = params["w1"].shape[-1]
    Cout = params["w2"].shape[-1]

    Ho, Wo = 2 * H1, 2 * W1
    diffY, diffX = H2 - Ho, W2 - Wo
    if diffY < 0 or diffX < 0:
        # TODO(synk): F.pad with negative pad (crop) not implemented.
        raise NotImplementedError("upsampled x1 larger than x2 is unsupported")

    Hp, Wp = H2 + 2, W2 + 2              # +1 zero ring for conv padding=1
    Np = Hp * Wp
    Npad = _round_up(Np, 128)            # lane-dense matmul N / output stores
    ext = _round_up(Wp + 1, 128)         # lane-aligned halo for static tap slices
    Next = Npad + 2 * ext

    # --- bilinear x2 upsample (align_corners=True) as two tiny separable
    #     matmuls in XLA (f32), then F.pad + conv ring, concat, flatten. ------
    Uy = jnp.asarray(_bilinear_matrix(H1, Ho))          # (Ho, H1)
    Ux = jnp.asarray(_bilinear_matrix(W1, Wo))          # (Wo, W1)
    x1f = x1.astype(jnp.float32)
    x1u = jnp.einsum("oh,bchw->bcow", Uy, x1f,
                     precision=jax.lax.Precision.HIGHEST)
    x1u = jnp.einsum("pw,bcow->bcop", Ux, x1u,
                     precision=jax.lax.Precision.HIGHEST)   # (B, C1, Ho, Wo)
    pt, pb = diffY // 2, diffY - diffY // 2
    pL, pR = diffX // 2, diffX - diffX // 2
    x1p = jnp.pad(x1u, ((0, 0), (0, 0), (1 + pt, 1 + pb), (1 + pL, 1 + pR)))
    x2p = jnp.pad(x2.astype(jnp.float32), ((0, 0), (0, 0), (1, 1), (1, 1)))
    xcat = jnp.concatenate([x2p, x1p], axis=1).reshape(B, Cin, Np)
    # halo + lane-tail zero padding; bf16 MXU operands (f32 accumulate in kernel)
    xk = jnp.pad(xcat, ((0, 0), (0, 0), (ext, Next - Np - ext))
                 ).astype(jnp.bfloat16)                     # (B, Cin, Next)

    # interior mask: re-zeroes h's pad ring + lane tail before conv2 (f32).
    ring = np.zeros((Hp, Wp), np.float32)
    ring[1:-1, 1:-1] = 1.0
    mask = np.zeros((1, Npad), np.float32)
    mask[0, :Np] = ring.reshape(-1)
    mask = jnp.asarray(mask)

    # per-tap weight layout (9, C_out_of_conv, C_in_of_conv); bf16 MXU operands.
    w1t = jnp.transpose(params["w1"], (0, 1, 3, 2)
                        ).reshape(9, Cmid, Cin).astype(jnp.bfloat16)
    w2t = jnp.transpose(params["w2"], (0, 1, 3, 2)
                        ).reshape(9, Cout, Cmid).astype(jnp.bfloat16)
    s1, b1 = _fold_bn(params["bn1_gamma"], params["bn1_beta"],
                      params["bn1_mean"], params["bn1_var"])
    s2, b2 = _fold_bn(params["bn2_gamma"], params["bn2_beta"],
                      params["bn2_mean"], params["bn2_var"])
    s1 = s1.reshape(Cmid, 1).astype(jnp.float32)
    b1 = b1.reshape(Cmid, 1).astype(jnp.float32)
    s2 = s2.reshape(Cout, 1).astype(jnp.float32)
    b2 = b2.reshape(Cout, 1).astype(jnp.float32)

    # explicit scoped-VMEM budget: scratch + double-buffered blocks + headroom.
    est = (2 * Cin * Next * 2                # x block (bf16), double-buffered
           + 2 * Cout * Npad * 4             # out block (f32), double-buffered
           + 2 * (9 * Cmid * Cin + 9 * Cout * Cmid) * 2
           + 2 * (Npad + 2 * Cmid + 2 * Cout) * 4
           + Cmid * Next * 2)                # hext scratch (bf16)
    vmem_limit = int(min(2 * est + (8 << 20), 64 << 20))

    kernel = functools.partial(_double_conv_kernel, Wp=Wp, Npad=Npad, ext=ext)
    out_flat = pl.pallas_call(
        kernel,
        out_shape=jax.ShapeDtypeStruct((B, Cout, Npad), jnp.float32),
        grid_spec=pltpu.PrefetchScalarGridSpec(
            num_scalar_prefetch=0,
            grid=(B,),
            in_specs=[
                pl.BlockSpec((1, Cin, Next), lambda b: (b, 0, 0)),
                # TODO(synk): single-buffer these grid-invariant operands via
                # pipeline_mode=pl.Buffered(1) once sizes make it worthwhile.
                pl.BlockSpec((1, Npad), lambda b: (0, 0)),
                pl.BlockSpec((9, Cmid, Cin), lambda b: (0, 0, 0)),
                pl.BlockSpec((Cmid, 1), lambda b: (0, 0)),
                pl.BlockSpec((Cmid, 1), lambda b: (0, 0)),
                pl.BlockSpec((9, Cout, Cmid), lambda b: (0, 0, 0)),
                pl.BlockSpec((Cout, 1), lambda b: (0, 0)),
                pl.BlockSpec((Cout, 1), lambda b: (0, 0)),
            ],
            out_specs=pl.BlockSpec((1, Cout, Npad), lambda b: (b, 0, 0)),
            scratch_shapes=[
                pltpu.VMEM((Cmid, Next), jnp.bfloat16),  # h + halos, VMEM-resident
            ],
        ),
        compiler_params=pltpu.CompilerParams(
            dimension_semantics=("parallel",),
            vmem_limit_bytes=vmem_limit),
        # TODO(synk): for real U-Net sizes, add a parallel row-strip grid axis
        # (strip of Hp rows + 1-row halo, strip-local Wp stride in the tap
        # offsets) to bound per-step VMEM and feed both v7x TensorCores.
    )(xk, mask, w1t, s1, b1, w2t, s2, b2)

    out = out_flat[:, :, :Np].reshape(B, Cout, Hp, Wp)[:, :, 1:Hp - 1, 1:Wp - 1]
    return out


# ----------------------------------------------------------------------------
# Pure-JAX reference (mirrors the PyTorch module) for a numerical self-check.
# ----------------------------------------------------------------------------
def _reference_up_forward(x1, x2, params):
    def up2(x):
        B, C, H, W = x.shape

        def coords(n_in, n_out):
            if n_in == 1:
                z = jnp.zeros((n_out,), jnp.int32)
                return z, z, jnp.zeros((n_out,), jnp.float32)
            pos = jnp.arange(n_out, dtype=jnp.float32) * (n_in - 1) / (n_out - 1)
            lo = jnp.floor(pos).astype(jnp.int32)
            hi = jnp.minimum(lo + 1, n_in - 1)
            return lo, hi, pos - lo.astype(jnp.float32)

        y0, y1, wy = coords(H, 2 * H)
        x0, x1i, wx = coords(W, 2 * W)
        top, bot = x[:, :, y0, :], x[:, :, y1, :]
        v = top * (1 - wy)[None, None, :, None] + bot * wy[None, None, :, None]
        left, right = v[:, :, :, x0], v[:, :, :, x1i]
        return left * (1 - wx) + right * wx

    def conv_bn_relu(x, w, g, bt, mu, var):
        y = jax.lax.conv_general_dilated(
            x, w, (1, 1), ((1, 1), (1, 1)),
            dimension_numbers=("NCHW", "HWIO", "NCHW"),
            precision=jax.lax.Precision.HIGHEST)
        s = g / jnp.sqrt(var + 1e-5)
        b = bt - mu * s
        return jnp.maximum(y * s[None, :, None, None] + b[None, :, None, None],
                           0.0)

    x1u = up2(x1.astype(jnp.float32))
    dY = x2.shape[2] - x1u.shape[2]
    dX = x2.shape[3] - x1u.shape[3]
    x1u = jnp.pad(x1u, ((0, 0), (0, 0),
                        (dY // 2, dY - dY // 2), (dX // 2, dX - dX // 2)))
    x = jnp.concatenate([x2.astype(jnp.float32), x1u], axis=1)
    h = conv_bn_relu(x, params["w1"], params["bn1_gamma"], params["bn1_beta"],
                     params["bn1_mean"], params["bn1_var"])
    return conv_bn_relu(h, params["w2"], params["bn2_gamma"],
                        params["bn2_beta"], params["bn2_mean"],
                        params["bn2_var"])


if __name__ == "__main__":
    key = jax.random.PRNGKey(0)

    # Up(in_channels=8, out_channels=4, bilinear=True)
    in_channels, out_channels = 8, 4
    mid_channels = in_channels // 2            # DoubleConv mid_channels
    B = 2
    C1 = in_channels // 2                      # low-res feature (upsampled x2)
    C2 = in_channels - C1                      # skip connection
    H1 = W1 = 8
    H2 = W2 = 16

    ks = jax.random.split(key, 12)
    x1 = jax.random.normal(ks[0], (B, C1, H1, W1), jnp.float32)
    x2 = jax.random.normal(ks[1], (B, C2, H2, W2), jnp.float32)

    params = {
        # conv1: Conv2d(in_channels, mid_channels, 3, padding=1, bias=False)
        "w1": 0.1 * jax.random.normal(ks[2], (3, 3, in_channels, mid_channels),
                                      jnp.float32),
        "bn1_gamma": 1.0 + 0.1 * jax.random.normal(ks[3], (mid_channels,)),
        "bn1_beta": 0.1 * jax.random.normal(ks[4], (mid_channels,)),
        "bn1_mean": 0.1 * jax.random.normal(ks[5], (mid_channels,)),
        "bn1_var": 0.5 + jnp.abs(jax.random.normal(ks[6], (mid_channels,))),
        # conv2: Conv2d(mid_channels, out_channels, 3, padding=1, bias=False)
        "w2": 0.1 * jax.random.normal(ks[7], (3, 3, mid_channels, out_channels),
                                      jnp.float32),
        "bn2_gamma": 1.0 + 0.1 * jax.random.normal(ks[8], (out_channels,)),
        "bn2_beta": 0.1 * jax.random.normal(ks[9], (out_channels,)),
        "bn2_mean": 0.1 * jax.random.normal(ks[10], (out_channels,)),
        "bn2_var": 0.5 + jnp.abs(jax.random.normal(ks[11], (out_channels,))),
    }

    out = jax.jit(up_forward)(x1, x2, params)
    out = jax.block_until_ready(out)
    assert out.shape == (B, out_channels, H2, W2), out.shape
    assert bool(jnp.all(jnp.isfinite(out)))

    ref = _reference_up_forward(x1, x2, params)
    err = float(jnp.max(jnp.abs(out - ref)))
    assert err < 5e-2, f"max abs error vs reference: {err}"

    print("KERNEL_OK")
</pallas_src>

<mosaic_0001>
module attributes {stable_mosaic.version = 11 : i64} {
  func.func @_double_conv_kernel(%arg0: i32, %arg1: memref<1x8x640xbf16, #tpu.memory_space<vmem>>, %arg2: memref<1x384xf32, #tpu.memory_space<vmem>>, %arg3: memref<9x4x8xbf16, #tpu.memory_space<vmem>>, %arg4: memref<4x1xf32, #tpu.memory_space<vmem>>, %arg5: memref<4x1xf32, #tpu.memory_space<vmem>>, %arg6: memref<9x4x4xbf16, #tpu.memory_space<vmem>>, %arg7: memref<4x1xf32, #tpu.memory_space<vmem>>, %arg8: memref<4x1xf32, #tpu.memory_space<vmem>>, %arg9: memref<1x4x384xf32, #tpu.memory_space<vmem>>, %arg10: memref<4x640xbf16, #tpu.memory_space<vmem>>) attributes {dimension_semantics = [#tpu.dimension_semantics<parallel>], iteration_bounds = array<i64: 2>, scalar_prefetch = 0 : i64, scratch_operands = 1 : i64, tpu.core_type = #tpu.core_type<tc>, window_params = [{transform_indices = @transform_0, window_bounds = array<i64: 1, 8, 640>}, {pipeline_mode = #tpu.pipeline_mode<synchronous>, transform_indices = @transform_1, window_bounds = array<i64: 1, 384>}, {pipeline_mode = #tpu.pipeline_mode<synchronous>, transform_indices = @transform_2, window_bounds = array<i64: 9, 4, 8>}, {pipeline_mode = #tpu.pipeline_mode<synchronous>, transform_indices = @transform_3, window_bounds = array<i64: 4, 1>}, {pipeline_mode = #tpu.pipeline_mode<synchronous>, transform_indices = @transform_4, window_bounds = array<i64: 4, 1>}, {pipeline_mode = #tpu.pipeline_mode<synchronous>, transform_indices = @transform_5, window_bounds = array<i64: 9, 4, 4>}, {pipeline_mode = #tpu.pipeline_mode<synchronous>, transform_indices = @transform_6, window_bounds = array<i64: 4, 1>}, {pipeline_mode = #tpu.pipeline_mode<synchronous>, transform_indices = @transform_7, window_bounds = array<i64: 4, 1>}, {transform_indices = @transform_8, window_bounds = array<i64: 1, 4, 384>}]} {
    %cst = arith.constant 0.000000e+00 : f32
    %0 = vector.broadcast %cst : f32 to vector<4x384xf32>
    %c0 = arith.constant 0 : index
    %c0_0 = arith.constant 0 : index
    %c0_1 = arith.constant 0 : index
    %1 = vector.load %arg3[%c0, %c0_0, %c0_1] : memref<9x4x8xbf16, #tpu.memory_space<vmem>>, vector<1x4x8xbf16>
    %2 = vector.shape_cast %1 : vector<1x4x8xbf16> to vector<4x8xbf16>
    %c0_i32 = arith.constant 0 : i32
    %c0_i32_2 = arith.constant 0 : i32
    %c0_i32_3 = arith.constant 0 : i32
    %3 = tpu.memref_slice %arg1[%c0_i32, %c0_i32_2, %c0_i32_3] : memref<1x8x640xbf16, #tpu.memory_space<vmem>> -> memref<1x8x640xbf16, #tpu.memory_space<vmem>>
    %4 = tpu.memref_squeeze %3 : memref<1x8x640xbf16, #tpu.memory_space<vmem>> -> memref<8x640xbf16, #tpu.memory_space<vmem>>
    %c0_4 = arith.constant 0 : index
    %c109 = arith.constant 109 : index
    %5 = vector.load %4[%c0_4, %c109] : memref<8x640xbf16, #tpu.memory_space<vmem>>, vector<8x384xbf16>
    %cst_5 = arith.constant dense<0.000000e+00> : vector<4x384xf32>
    %6 = tpu.matmul %2, %5, %cst_5 {dimension_numbers = #tpu.dot_dimension_numbers<[1], [0], [0], [1], [0, 0, 1, 1], [], []>} : vector<4x8xbf16>, vector<8x384xbf16>, vector<4x384xf32> -> vector<4x384xf32>
    %7 = arith.addf %0, %6 : vector<4x384xf32>
    %c1 = arith.constant 1 : index
    %c0_6 = arith.constant 0 : index
    %c0_7 = arith.constant 0 : index
    %8 = vector.load %arg3[%c1, %c0_6, %c0_7] : memref<9x4x8xbf16, #tpu.memory_space<vmem>>, vector<1x4x8xbf16>
    %9 = vector.shape_cast %8 : vector<1x4x8xbf16> to vector<4x8xbf16>
    %c0_i32_8 = arith.constant 0 : i32
    %c0_i32_9 = arith.constant 0 : i32
    %c0_i32_10 = arith.constant 0 : i32
    %10 = tpu.memref_slice %arg1[%c0_i32_8, %c0_i32_9, %c0_i32_10] : memref<1x8x640xbf16, #tpu.memory_space<vmem>> -> memref<1x8x640xbf16, #tpu.memory_space<vmem>>
    %11 = tpu.memref_squeeze %10 : memref<1x8x640xbf16, #tpu.memory_space<vmem>> -> memref<8x640xbf16, #tpu.memory_space<vmem>>
    %c0_11 = arith.constant 0 : index
    %c110 = arith.constant 110 : index
    %12 = vector.load %11[%c0_11, %c110] : memref<8x640xbf16, #tpu.memory_space<vmem>>, vector<8x384xbf16>
    %cst_12 = arith.constant dense<0.000000e+00> : vector<4x384xf32>
    %13 = tpu.matmul %9, %12, %cst_12 {dimension_numbers = #tpu.dot_dimension_numbers<[1], [0], [0], [1], [0, 0, 1, 1], [], []>} : vector<4x8xbf16>, vector<8x384xbf16>, vector<4x384xf32> -> vector<4x384xf32>
    %14 = arith.addf %7, %13 : vector<4x384xf32>
    %c2 = arith.constant 2 : index
    %c0_13 = arith.constant 0 : index
    %c0_14 = arith.constant 0 : index
    %15 = vector.load %arg3[%c2, %c0_13, %c0_14] : memref<9x4x8xbf16, #tpu.memory_space<vmem>>, vector<1x4x8xbf16>
    %16 = vector.shape_cast %15 : vector<1x4x8xbf16> to vector<4x8xbf16>
    %c0_i32_15 = arith.constant 0 : i32
    %c0_i32_16 = arith.constant 0 : i32
    %c0_i32_17 = arith.constant 0 : i32
    %17 = tpu.memref_slice %arg1[%c0_i32_15, %c0_i32_16, %c0_i32_17] : memref<1x8x640xbf16, #tpu.memory_space<vmem>> -> memref<1x8x640xbf16, #tpu.memory_space<vmem>>
    %18 = tpu.memref_squeeze %17 : memref<1x8x640xbf16, #tpu.memory_space<vmem>> -> memref<8x640xbf16, #tpu.memory_space<vmem>>
    %c0_18 = arith.constant 0 : index
    %c111 = arith.constant 111 : index
    %19 = vector.load %18[%c0_18, %c111] : memref<8x640xbf16, #tpu.memory_space<vmem>>, vector<8x384xbf16>
    %cst_19 = arith.constant dense<0.000000e+00> : vector<4x384xf32>
    %20 = tpu.matmul %16, %19, %cst_19 {dimension_numbers = #tpu.dot_dimension_numbers<[1], [0], [0], [1], [0, 0, 1, 1], [], []>} : vector<4x8xbf16>, vector<8x384xbf16>, vector<4x384xf32> -> vector<4x384xf32>
    %21 = arith.addf %14, %20 : vector<4x384xf32>
    %c3 = arith.constant 3 : index
    %c0_20 = arith.constant 0 : index
    %c0_21 = arith.constant 0 : index
    %22 = vector.load %arg3[%c3, %c0_20, %c0_21] : memref<9x4x8xbf16, #tpu.memory_space<vmem>>, vector<1x4x8xbf16>
    %23 = vector.shape_cast %22 : vector<1x4x8xbf16> to vector<4x8xbf16>
    %c0_i32_22 = arith.constant 0 : i32
    %c0_i32_23 = arith.constant 0 : i32
    %c0_i32_24 = arith.constant 0 : i32
    %24 = tpu.memref_slice %arg1[%c0_i32_22, %c0_i32_23, %c0_i32_24] : memref<1x8x640xbf16, #tpu.memory_space<vmem>> -> memref<1x8x640xbf16, #tpu.memory_space<vmem>>
    %25 = tpu.memref_squeeze %24 : memref<1x8x640xbf16, #tpu.memory_space<vmem>> -> memref<8x640xbf16, #tpu.memory_space<vmem>>
    %c0_25 = arith.constant 0 : index
    %c127 = arith.constant 127 : index
    %26 = vector.load %25[%c0_25, %c127] : memref<8x640xbf16, #tpu.memory_space<vmem>>, vector<8x384xbf16>
    %cst_26 = arith.constant dense<0.000000e+00> : vector<4x384xf32>
    %27 = tpu.matmul %23, %26, %cst_26 {dimension_numbers = #tpu.dot_dimension_numbers<[1], [0], [0], [1], [0, 0, 1, 1], [], []>} : vector<4x8xbf16>, vector<8x384xbf16>, vector<4x384xf32> -> vector<4x384xf32>
    %28 = arith.addf %21, %27 : vector<4x384xf32>
    %c4 = arith.constant 4 : index
    %c0_27 = arith.constant 0 : index
    %c0_28 = arith.constant 0 : index
    %29 = vector.load %arg3[%c4, %c0_27, %c0_28] : memref<9x4x8xbf16, #tpu.memory_space<vmem>>, vector<1x4x8xbf16>
    %30 = vector.shape_cast %29 : vector<1x4x8xbf16> to vector<4x8xbf16>
    %c0_i32_29 = arith.constant 0 : i32
    %c0_i32_30 = arith.constant 0 : i32
    %c0_i32_31 = arith.constant 0 : i32
    %31 = tpu.memref_slice %arg1[%c0_i32_29, %c0_i32_30, %c0_i32_31] : memref<1x8x640xbf16, #tpu.memory_space<vmem>> -> memref<1x8x640xbf16, #tpu.memory_space<vmem>>
    %32 = tpu.memref_squeeze %31 : memref<1x8x640xbf16, #tpu.memory_space<vmem>> -> memref<8x640xbf16, #tpu.memory_space<vmem>>
    %c0_32 = arith.constant 0 : index
    %c128 = arith.constant 128 : index
    %33 = vector.load %32[%c0_32, %c128] : memref<8x640xbf16, #tpu.memory_space<vmem>>, vector<8x384xbf16>
    %cst_33 = arith.constant dense<0.000000e+00> : vector<4x384xf32>
    %34 = tpu.matmul %30, %33, %cst_33 {dimension_numbers = #tpu.dot_dimension_numbers<[1], [0], [0], [1], [0, 0, 1, 1], [], []>} : vector<4x8xbf16>, vector<8x384xbf16>, vector<4x384xf32> -> vector<4x384xf32>
    %35 = arith.addf %28, %34 : vector<4x384xf32>
    %c5 = arith.constant 5 : index
    %c0_34 = arith.constant 0 : index
    %c0_35 = arith.constant 0 : index
    %36 = vector.load %arg3[%c5, %c0_34, %c0_35] : memref<9x4x8xbf16, #tpu.memory_space<vmem>>, vector<1x4x8xbf16>
    %37 = vector.shape_cast %36 : vector<1x4x8xbf16> to vector<4x8xbf16>
    %c0_i32_36 = arith.constant 0 : i32
    %c0_i32_37 = arith.constant 0 : i32
    %c0_i32_38 = arith.constant 0 : i32
    %38 = tpu.memref_slice %arg1[%c0_i32_36, %c0_i32_37, %c0_i32_38] : memref<1x8x640xbf16, #tpu.memory_space<vmem>> -> memref<1x8x640xbf16, #tpu.memory_space<vmem>>
    %39 = tpu.memref_squeeze %38 : memref<1x8x640xbf16, #tpu.memory_space<vmem>> -> memref<8x640xbf16, #tpu.memory_space<vmem>>
    %c0_39 = arith.constant 0 : index
    %c129 = arith.constant 129 : index
    %40 = vector.load %39[%c0_39, %c129] : memref<8x640xbf16, #tpu.memory_space<vmem>>, vector<8x384xbf16>
    %cst_40 = arith.constant dense<0.000000e+00> : vector<4x384xf32>
    %41 = tpu.matmul %37, %40, %cst_40 {dimension_numbers = #tpu.dot_dimension_numbers<[1], [0], [0], [1], [0, 0, 1, 1], [], []>} : vector<4x8xbf16>, vector<8x384xbf16>, vector<4x384xf32> -> vector<4x384xf32>
    %42 = arith.addf %35, %41 : vector<4x384xf32>
    %c6 = arith.constant 6 : index
    %c0_41 = arith.constant 0 : index
    %c0_42 = arith.constant 0 : index
    %43 = vector.load %arg3[%c6, %c0_41, %c0_42] : memref<9x4x8xbf16, #tpu.memory_space<vmem>>, vector<1x4x8xbf16>
    %44 = vector.shape_cast %43 : vector<1x4x8xbf16> to vector<4x8xbf16>
    %c0_i32_43 = arith.constant 0 : i32
    %c0_i32_44 = arith.constant 0 : i32
    %c0_i32_45 = arith.constant 0 : i32
    %45 = tpu.memref_slice %arg1[%c0_i32_43, %c0_i32_44, %c0_i32_45] : memref<1x8x640xbf16, #tpu.memory_space<vmem>> -> memref<1x8x640xbf16, #tpu.memory_space<vmem>>
    %46 = tpu.memref_squeeze %45 : memref<1x8x640xbf16, #tpu.memory_space<vmem>> -> memref<8x640xbf16, #tpu.memory_space<vmem>>
    %c0_46 = arith.constant 0 : index
    %c145 = arith.constant 145 : index
    %47 = vector.load %46[%c0_46, %c145] : memref<8x640xbf16, #tpu.memory_space<vmem>>, vector<8x384xbf16>
    %cst_47 = arith.constant dense<0.000000e+00> : vector<4x384xf32>
    %48 = tpu.matmul %44, %47, %cst_47 {dimension_numbers = #tpu.dot_dimension_numbers<[1], [0], [0], [1], [0, 0, 1, 1], [], []>} : vector<4x8xbf16>, vector<8x384xbf16>, vector<4x384xf32> -> vector<4x384xf32>
    %49 = arith.addf %42, %48 : vector<4x384xf32>
    %c7 = arith.constant 7 : index
    %c0_48 = arith.constant 0 : index
    %c0_49 = arith.constant 0 : index
    %50 = vector.load %arg3[%c7, %c0_48, %c0_49] : memref<9x4x8xbf16, #tpu.memory_space<vmem>>, vector<1x4x8xbf16>
    %51 = vector.shape_cast %50 : vector<1x4x8xbf16> to vector<4x8xbf16>
    %c0_i32_50 = arith.constant 0 : i32
    %c0_i32_51 = arith.constant 0 : i32
    %c0_i32_52 = arith.constant 0 : i32
    %52 = tpu.memref_slice %arg1[%c0_i32_50, %c0_i32_51, %c0_i32_52] : memref<1x8x640xbf16, #tpu.memory_space<vmem>> -> memref<1x8x640xbf16, #tpu.memory_space<vmem>>
    %53 = tpu.memref_squeeze %52 : memref<1x8x640xbf16, #tpu.memory_space<vmem>> -> memref<8x640xbf16, #tpu.memory_space<vmem>>
    %c0_53 = arith.constant 0 : index
    %c146 = arith.constant 146 : index
    %54 = vector.load %53[%c0_53, %c146] : memref<8x640xbf16, #tpu.memory_space<vmem>>, vector<8x384xbf16>
    %cst_54 = arith.constant dense<0.000000e+00> : vector<4x384xf32>
    %55 = tpu.matmul %51, %54, %cst_54 {dimension_numbers = #tpu.dot_dimension_numbers<[1], [0], [0], [1], [0, 0, 1, 1], [], []>} : vector<4x8xbf16>, vector<8x384xbf16>, vector<4x384xf32> -> vector<4x384xf32>
    %56 = arith.addf %49, %55 : vector<4x384xf32>
    %c8 = arith.constant 8 : index
    %c0_55 = arith.constant 0 : index
    %c0_56 = arith.constant 0 : index
    %57 = vector.load %arg3[%c8, %c0_55, %c0_56] : memref<9x4x8xbf16, #tpu.memory_space<vmem>>, vector<1x4x8xbf16>
    %58 = vector.shape_cast %57 : vector<1x4x8xbf16> to vector<4x8xbf16>
    %c0_i32_57 = arith.constant 0 : i32
    %c0_i32_58 = arith.constant 0 : i32
    %c0_i32_59 = arith.constant 0 : i32
    %59 = tpu.memref_slice %arg1[%c0_i32_57, %c0_i32_58, %c0_i32_59] : memref<1x8x640xbf16, #tpu.memory_space<vmem>> -> memref<1x8x640xbf16, #tpu.memory_space<vmem>>
    %60 = tpu.memref_squeeze %59 : memref<1x8x640xbf16, #tpu.memory_space<vmem>> -> memref<8x640xbf16, #tpu.memory_space<vmem>>
    %c0_60 = arith.constant 0 : index
    %c147 = arith.constant 147 : index
    %61 = vector.load %60[%c0_60, %c147] : memref<8x640xbf16, #tpu.memory_space<vmem>>, vector<8x384xbf16>
    %cst_61 = arith.constant dense<0.000000e+00> : vector<4x384xf32>
    %62 = tpu.matmul %58, %61, %cst_61 {dimension_numbers = #tpu.dot_dimension_numbers<[1], [0], [0], [1], [0, 0, 1, 1], [], []>} : vector<4x8xbf16>, vector<8x384xbf16>, vector<4x384xf32> -> vector<4x384xf32>
    %63 = arith.addf %56, %62 : vector<4x384xf32>
    %c0_62 = arith.constant 0 : index
    %c0_63 = arith.constant 0 : index
    %64 = vector.load %arg4[%c0_62, %c0_63] : memref<4x1xf32, #tpu.memory_space<vmem>>, vector<4x1xf32>
    %65 = vector.broadcast %64 : vector<4x1xf32> to vector<4x384xf32>
    %66 = arith.mulf %63, %65 : vector<4x384xf32>
    %c0_64 = arith.constant 0 : index
    %c0_65 = arith.constant 0 : index
    %67 = vector.load %arg5[%c0_64, %c0_65] : memref<4x1xf32, #tpu.memory_space<vmem>>, vector<4x1xf32>
    %68 = vector.broadcast %67 : vector<4x1xf32> to vector<4x384xf32>
    %69 = arith.addf %66, %68 : vector<4x384xf32>
    %cst_66 = arith.constant 0.000000e+00 : f32
    %70 = vector.broadcast %cst_66 : f32 to vector<4x384xf32>
    %71 = arith.maximumf %69, %70 : vector<4x384xf32>
    %c0_67 = arith.constant 0 : index
    %c0_68 = arith.constant 0 : index
    %72 = vector.load %arg2[%c0_67, %c0_68] : memref<1x384xf32, #tpu.memory_space<vmem>>, vector<1x384xf32>
    %73 = vector.broadcast %72 : vector<1x384xf32> to vector<4x384xf32>
    %74 = arith.mulf %71, %73 : vector<4x384xf32>
    %cst_69 = arith.constant 0.000000e+00 : bf16
    %75 = vector.broadcast %cst_69 : bf16 to vector<4x128xbf16>
    %c0_70 = arith.constant 0 : index
    %c0_71 = arith.constant 0 : index
    %76 = vector.load %arg10[%c0_70, %c0_71] : memref<4x640xbf16, #tpu.memory_space<vmem>>, vector<4x128xbf16>
    tpu.vector_store %arg10[%c0_70, %c0_71], %75 {strides = array<i32>} : memref<4x640xbf16, #tpu.memory_space<vmem>>, vector<4x128xbf16>,
    %cst_72 = arith.constant 0.000000e+00 : bf16
    %77 = vector.broadcast %cst_72 : bf16 to vector<4x128xbf16>
    %c0_73 = arith.constant 0 : index
    %c512 = arith.constant 512 : index
    %78 = vector.load %arg10[%c0_73, %c512] : memref<4x640xbf16, #tpu.memory_space<vmem>>, vector<4x128xbf16>
    tpu.vector_store %arg10[%c0_73, %c512], %77 {strides = array<i32>} : memref<4x640xbf16, #tpu.memory_space<vmem>>, vector<4x128xbf16>,
    %79 = arith.truncf %74 : vector<4x384xf32> to vector<4x384xbf16>
    %c0_74 = arith.constant 0 : index
    %c128_75 = arith.constant 128 : index
    %80 = vector.load %arg10[%c0_74, %c128_75] : memref<4x640xbf16, #tpu.memory_space<vmem>>, vector<4x384xbf16>
    tpu.vector_store %arg10[%c0_74, %c128_75], %79 {strides = array<i32>} : memref<4x640xbf16, #tpu.memory_space<vmem>>, vector<4x384xbf16>,
    %cst_76 = arith.constant 0.000000e+00 : f32
    %81 = vector.broadcast %cst_76 : f32 to vector<4x384xf32>
    %c0_77 = arith.constant 0 : index
    %c0_78 = arith.constant 0 : index
    %c0_79 = arith.constant 0 : index
    %82 = vector.load %arg6[%c0_77, %c0_78, %c0_79] : memref<9x4x4xbf16, #tpu.memory_space<vmem>>, vector<1x4x4xbf16>
    %83 = vector.shape_cast %82 : vector<1x4x4xbf16> to vector<4x4xbf16>
    %c0_80 = arith.constant 0 : index
    %c109_81 = arith.constant 109 : index
    %84 = vector.load %arg10[%c0_80, %c109_81] : memref<4x640xbf16, #tpu.memory_space<vmem>>, vector<4x384xbf16>
    %cst_82 = arith.constant dense<0.000000e+00> : vector<4x384xf32>
    %85 = tpu.matmul %83, %84, %cst_82 {dimension_numbers = #tpu.dot_dimension_numbers<[1], [0], [0], [1], [0, 0, 1, 1], [], []>} : vector<4x4xbf16>, vector<4x384xbf16>, vector<4x384xf32> -> vector<4x384xf32>
    %86 = arith.addf %81, %85 : vector<4x384xf32>
    %c1_83 = arith.constant 1 : index
    %c0_84 = arith.constant 0 : index
    %c0_85 = arith.constant 0 : index
    %87 = vector.load %arg6[%c1_83, %c0_84, %c0_85] : memref<9x4x4xbf16, #tpu.memory_space<vmem>>, vector<1x4x4xbf16>
    %88 = vector.shape_cast %87 : vector<1x4x4xbf16> to vector<4x4xbf16>
    %c0_86 = arith.constant 0 : index
    %c110_87 = arith.constant 110 : index
    %89 = vector.load %arg10[%c0_86, %c110_87] : memref<4x640xbf16, #tpu.memory_space<vmem>>, vector<4x384xbf16>
    %cst_88 = arith.constant dense<0.000000e+00> : vector<4x384xf32>
    %90 = tpu.matmul %88, %89, %cst_88 {dimension_numbers = #tpu.dot_dimension_numbers<[1], [0], [0], [1], [0, 0, 1, 1], [], []>} : vector<4x4xbf16>, vector<4x384xbf16>, vector<4x384xf32> -> vector<4x384xf32>
    %91 = arith.addf %86, %90 : vector<4x384xf32>
    %c2_89 = arith.constant 2 : index
    %c0_90 = arith.constant 0 : index
    %c0_91 = arith.constant 0 : index
    %92 = vector.load %arg6[%c2_89, %c0_90, %c0_91] : memref<9x4x4xbf16, #tpu.memory_space<vmem>>, vector<1x4x4xbf16>
    %93 = vector.shape_cast %92 : vector<1x4x4xbf16> to vector<4x4xbf16>
    %c0_92 = arith.constant 0 : index
    %c111_93 = arith.constant 111 : index
    %94 = vector.load %arg10[%c0_92, %c111_93] : memref<4x640xbf16, #tpu.memory_space<vmem>>, vector<4x384xbf16>
    %cst_94 = arith.constant dense<0.000000e+00> : vector<4x384xf32>
    %95 = tpu.matmul %93, %94, %cst_94 {dimension_numbers = #tpu.dot_dimension_numbers<[1], [0], [0], [1], [0, 0, 1, 1], [], []>} : vector<4x4xbf16>, vector<4x384xbf16>, vector<4x384xf32> -> vector<4x384xf32>
    %96 = arith.addf %91, %95 : vector<4x384xf32>
    %c3_95 = arith.constant 3 : index
    %c0_96 = arith.constant 0 : index
    %c0_97 = arith.constant 0 : index
    %97 = vector.load %arg6[%c3_95, %c0_96, %c0_97] : memref<9x4x4xbf16, #tpu.memory_space<vmem>>, vector<1x4x4xbf16>
    %98 = vector.shape_cast %97 : vector<1x4x4xbf16> to vector<4x4xbf16>
    %c0_98 = arith.constant 0 : index
    %c127_99 = arith.constant 127 : index
    %99 = vector.load %arg10[%c0_98, %c127_99] : memref<4x640xbf16, #tpu.memory_space<vmem>>, vector<4x384xbf16>
    %cst_100 = arith.constant dense<0.000000e+00> : vector<4x384xf32>
    %100 = tpu.matmul %98, %99, %cst_100 {dimension_numbers = #tpu.dot_dimension_numbers<[1], [0], [0], [1], [0, 0, 1, 1], [], []>} : vector<4x4xbf16>, vector<4x384xbf16>, vector<4x384xf32> -> vector<4x384xf32>
    %101 = arith.addf %96, %100 : vector<4x384xf32>
    %c4_101 = arith.constant 4 : index
    %c0_102 = arith.constant 0 : index
    %c0_103 = arith.constant 0 : index
    %102 = vector.load %arg6[%c4_101, %c0_102, %c0_103] : memref<9x4x4xbf16, #tpu.memory_space<vmem>>, vector<1x4x4xbf16>
    %103 = vector.shape_cast %102 : vector<1x4x4xbf16> to vector<4x4xbf16>
    %c0_104 = arith.constant 0 : index
    %c128_105 = arith.constant 128 : index
    %104 = vector.load %arg10[%c0_104, %c128_105] : memref<4x640xbf16, #tpu.memory_space<vmem>>, vector<4x384xbf16>
    %cst_106 = arith.constant dense<0.000000e+00> : vector<4x384xf32>
    %105 = tpu.matmul %103, %104, %cst_106 {dimension_numbers = #tpu.dot_dimension_numbers<[1], [0], [0], [1], [0, 0, 1, 1], [], []>} : vector<4x4xbf16>, vector<4x384xbf16>, vector<4x384xf32> -> vector<4x384xf32>
    %106 = arith.addf %101, %105 : vector<4x384xf32>
    %c5_107 = arith.constant 5 : index
    %c0_108 = arith.constant 0 : index
    %c0_109 = arith.constant 0 : index
    %107 = vector.load %arg6[%c5_107, %c0_108, %c0_109] : memref<9x4x4xbf16, #tpu.memory_space<vmem>>, vector<1x4x4xbf16>
    %108 = vector.shape_cast %107 : vector<1x4x4xbf16> to vector<4x4xbf16>
    %c0_110 = arith.constant 0 : index
    %c129_111 = arith.constant 129 : index
    %109 = vector.load %arg10[%c0_110, %c129_111] : memref<4x640xbf16, #tpu.memory_space<vmem>>, vector<4x384xbf16>
    %cst_112 = arith.constant dense<0.000000e+00> : vector<4x384xf32>
    %110 = tpu.matmul %108, %109, %cst_112 {dimension_numbers = #tpu.dot_dimension_numbers<[1], [0], [0], [1], [0, 0, 1, 1], [], []>} : vector<4x4xbf16>, vector<4x384xbf16>, vector<4x384xf32> -> vector<4x384xf32>
    %111 = arith.addf %106, %110 : vector<4x384xf32>
    %c6_113 = arith.constant 6 : index
    %c0_114 = arith.constant 0 : index
    %c0_115 = arith.constant 0 : index
    %112 = vector.load %arg6[%c6_113, %c0_114, %c0_115] : memref<9x4x4xbf16, #tpu.memory_space<vmem>>, vector<1x4x4xbf16>
    %113 = vector.shape_cast %112 : vector<1x4x4xbf16> to vector<4x4xbf16>
    %c0_116 = arith.constant 0 : index
    %c145_117 = arith.constant 145 : index
    %114 = vector.load %arg10[%c0_116, %c145_117] : memref<4x640xbf16, #tpu.memory_space<vmem>>, vector<4x384xbf16>
    %cst_118 = arith.constant dense<0.000000e+00> : vector<4x384xf32>
    %115 = tpu.matmul %113, %114, %cst_118 {dimension_numbers = #tpu.dot_dimension_numbers<[1], [0], [0], [1], [0, 0, 1, 1], [], []>} : vector<4x4xbf16>, vector<4x384xbf16>, vector<4x384xf32> -> vector<4x384xf32>
    %116 = arith.addf %111, %115 : vector<4x384xf32>
    %c7_119 = arith.constant 7 : index
    %c0_120 = arith.constant 0 : index
    %c0_121 = arith.constant 0 : index
    %117 = vector.load %arg6[%c7_119, %c0_120, %c0_121] : memref<9x4x4xbf16, #tpu.memory_space<vmem>>, vector<1x4x4xbf16>
    %118 = vector.shape_cast %117 : vector<1x4x4xbf16> to vector<4x4xbf16>
    %c0_122 = arith.constant 0 : index
    %c146_123 = arith.constant 146 : index
    %119 = vector.load %arg10[%c0_122, %c146_123] : memref<4x640xbf16, #tpu.memory_space<vmem>>, vector<4x384xbf16>
    %cst_124 = arith.constant dense<0.000000e+00> : vector<4x384xf32>
    %120 = tpu.matmul %118, %119, %cst_124 {dimension_numbers = #tpu.dot_dimension_numbers<[1], [0], [0], [1], [0, 0, 1, 1], [], []>} : vector<4x4xbf16>, vector<4x384xbf16>, vector<4x384xf32> -> vector<4x384xf32>
    %121 = arith.addf %116, %120 : vector<4x384xf32>
    %c8_125 = arith.constant 8 : index
    %c0_126 = arith.constant 0 : index
    %c0_127 = arith.constant 0 : index
    %122 = vector.load %arg6[%c8_125, %c0_126, %c0_127] : memref<9x4x4xbf16, #tpu.memory_space<vmem>>, vector<1x4x4xbf16>
    %123 = vector.shape_cast %122 : vector<1x4x4xbf16> to vector<4x4xbf16>
    %c0_128 = arith.constant 0 : index
    %c147_129 = arith.constant 147 : index
    %124 = vector.load %arg10[%c0_128, %c147_129] : memref<4x640xbf16, #tpu.memory_space<vmem>>, vector<4x384xbf16>
    %cst_130 = arith.constant dense<0.000000e+00> : vector<4x384xf32>
    %125 = tpu.matmul %123, %124, %cst_130 {dimension_numbers = #tpu.dot_dimension_numbers<[1], [0], [0], [1], [0, 0, 1, 1], [], []>} : vector<4x4xbf16>, vector<4x384xbf16>, vector<4x384xf32> -> vector<4x384xf32>
    %126 = arith.addf %121, %125 : vector<4x384xf32>
    %c0_131 = arith.constant 0 : index
    %c0_132 = arith.constant 0 : index
    %127 = vector.load %arg7[%c0_131, %c0_132] : memref<4x1xf32, #tpu.memory_space<vmem>>, vector<4x1xf32>
    %128 = vector.broadcast %127 : vector<4x1xf32> to vector<4x384xf32>
    %129 = arith.mulf %126, %128 : vector<4x384xf32>
    %c0_133 = arith.constant 0 : index
    %c0_134 = arith.constant 0 : index
    %130 = vector.load %arg8[%c0_133, %c0_134] : memref<4x1xf32, #tpu.memory_space<vmem>>, vector<4x1xf32>
    %131 = vector.broadcast %130 : vector<4x1xf32> to vector<4x384xf32>
    %132 = arith.addf %129, %131 : vector<4x384xf32>
    %cst_135 = arith.constant 0.000000e+00 : f32
    %133 = vector.broadcast %cst_135 : f32 to vector<4x384xf32>
    %134 = arith.maximumf %132, %133 : vector<4x384xf32>
    %c0_136 = arith.constant 0 : index
    %c0_137 = arith.constant 0 : index
    %c0_138 = arith.constant 0 : index
    %135 = vector.load %arg9[%c0_136, %c0_137, %c0_138] : memref<1x4x384xf32, #tpu.memory_space<vmem>>, vector<1x4x384xf32>
    %136 = vector.shape_cast %135 : vector<1x4x384xf32> to vector<4x384xf32>
    %137 = vector.shape_cast %134 : vector<4x384xf32> to vector<1x4x384xf32>
    tpu.vector_store %arg9[%c0_136, %c0_137, %c0_138], %137 {strides = array<i32>} : memref<1x4x384xf32, #tpu.memory_space<vmem>>, vector<1x4x384xf32>,
    return
  }
  func.func @transform_0(%arg0: i32) -> (i32, i32, i32) {
    %c0_i32 = arith.constant 0 : i32
    %c0_i32_0 = arith.constant 0 : i32
    %c0_i32_1 = arith.constant 0 : i32
    return %arg0, %c0_i32, %c0_i32_0 : i32, i32, i32
  }
  func.func @transform_1(%arg0: i32) -> (i32, i32) {
    %c0_i32 = arith.constant 0 : i32
    %c0_i32_0 = arith.constant 0 : i32
    %c0_i32_1 = arith.constant 0 : i32
    return %c0_i32, %c0_i32_0 : i32, i32
  }
  func.func @transform_2(%arg0: i32) -> (i32, i32, i32) {
    %c0_i32 = arith.constant 0 : i32
    %c0_i32_0 = arith.constant 0 : i32
    %c0_i32_1 = arith.constant 0 : i32
    %c0_i32_2 = arith.constant 0 : i32
    return %c0_i32, %c0_i32_0, %c0_i32_1 : i32, i32, i32
  }
  func.func @transform_3(%arg0: i32) -> (i32, i32) {
    %c0_i32 = arith.constant 0 : i32
    %c0_i32_0 = arith.constant 0 : i32
    %c0_i32_1 = arith.constant 0 : i32
    return %c0_i32, %c0_i32_0 : i32, i32
  }
  func.func @transform_4(%arg0: i32) -> (i32, i32) {
    %c0_i32 = arith.constant 0 : i32
    %c0_i32_0 = arith.constant 0 : i32
    %c0_i32_1 = arith.constant 0 : i32
    return %c0_i32, %c0_i32_0 : i32, i32
  }
  func.func @transform_5(%arg0: i32) -> (i32, i32, i32) {
    %c0_i32 = arith.constant 0 : i32
    %c0_i32_0 = arith.constant 0 : i32
    %c0_i32_1 = arith.constant 0 : i32
    %c0_i32_2 = arith.constant 0 : i32
    return %c0_i32, %c0_i32_0, %c0_i32_1 : i32, i32, i32
  }
  func.func @transform_6(%arg0: i32) -> (i32, i32) {
    %c0_i32 = arith.constant 0 : i32
    %c0_i32_0 = arith.constant 0 : i32
    %c0_i32_1 = arith.constant 0 : i32
    return %c0_i32, %c0_i32_0 : i32, i32
  }
  func.func @transform_7(%arg0: i32) -> (i32, i32) {
    %c0_i32 = arith.constant 0 : i32
    %c0_i32_0 = arith.constant 0 : i32
    %c0_i32_1 = arith.constant 0 : i32
    return %c0_i32, %c0_i32_0 : i32, i32
  }
  func.func @transform_8(%arg0: i32) -> (i32, i32, i32) {
    %c0_i32 = arith.constant 0 : i32
    %c0_i32_0 = arith.constant 0 : i32
    %c0_i32_1 = arith.constant 0 : i32
    return %arg0, %c0_i32, %c0_i32_0 : i32, i32, i32
  }
}

</mosaic_0001>

<llo_original>
// kernel: up_forward.1
$region0: #{up_forward.1}
  #allocation0 [shape = 'u32[]', space=smem, size = 0x4, offset = 0x4, fixed_abs, tag = 'smem constant byte address 0x4 - core index']
  #allocation1 [shape = 'u32[144,128]{1,0:T(1,128)}', space=vmem, size = 0x12000, scoped, tag = 'internal scratch']
  #allocation2 [shape = 'bf16[4,640]{1,0:T(4,128)(2,1)}', space=vmem, size = 0x1400, scoped, tag = 'scratch operand']
  %s0 = inlined_call_operand.vmem [shape: bf16[2,8,640], index: 0, kind: input, shape index: {}]
  %s1 = inlined_call_operand.vmem [shape: f32[1,384], index: 1, kind: input, shape index: {}]
  %s2 = inlined_call_operand.vmem [shape: bf16[9,4,8], index: 2, kind: input, shape index: {}]
  %s3 = inlined_call_operand.vmem [shape: f32[4,1], index: 3, kind: input, shape index: {}]
  %s4 = inlined_call_operand.vmem [shape: f32[4,1], index: 4, kind: input, shape index: {}]
  %s5 = inlined_call_operand.vmem [shape: bf16[9,4,4], index: 5, kind: input, shape index: {}]
  %s6 = inlined_call_operand.vmem [shape: f32[4,1], index: 6, kind: input, shape index: {}]
  %s7 = inlined_call_operand.vmem [shape: f32[4,1], index: 7, kind: input, shape index: {}]
  %s8 = inlined_call_operand.vmem [shape: f32[2,4,384], index: 8, kind: output, shape index: {}]
  %s9 = sld [smem:[#allocation0]]
  $region65: #{up_forward.1} parent=0
    _
  %s11 = ssub.s32 1, %s9
  %s12 = scalar_select 0, %s11, %s9
  loop: start=0, step=1, limit=4
  $region2: #{up_forward.1} parent=0 // loop_pre_header
    _
  $region3: #{up_forward.1} parent=0 // loop_header
    %s14 = sphi 0, %s18
    %p15 = scmp.ge.s32.totalorder %s14, 4
    %s24 = sphi 0, %s26
    %s27 = sphi 0, %s24
    %s28 = sphi 0, %s27
    %s44 = sphi 0, %s28
    %s48 = sphi 0, %s48
    %s50 = sphi 0, %s48
    %s51 = sphi 0, %s50
    %s65 = sphi 0, %s51
    %s69 = sphi 0, %s69
    %s71 = sphi 0, %s69
    %s72 = sphi 0, %s71
    %s86 = sphi 0, %s72
    %s90 = sphi 0, %s90
    %s92 = sphi 0, %s90
    %s93 = sphi 0, %s92
    %s107 = sphi 0, %s93
    %s111 = sphi 0, %s111
    %s113 = sphi 0, %s111
    %s114 = sphi 0, %s113
    %s128 = sphi 0, %s114
    %s132 = sphi 0, %s132
    %s134 = sphi 0, %s132
    %s135 = sphi 0, %s134
    %s149 = sphi 0, %s135
    %s153 = sphi 0, %s153
    %s155 = sphi 0, %s153
    %s156 = sphi 0, %s155
    %s170 = sphi 0, %s156
    %s174 = sphi 0, %s174
    %s176 = sphi 0, %s174
    %s177 = sphi 0, %s176
    %s191 = sphi 0, %s177
    %s197 = sphi 0, %s199
    %s200 = sphi 0, %s197
    %s201 = sphi 0, %s200
    %s217 = sphi 0, %s201
  $region4: #{up_forward.1} parent=0 // loop_header_branch
    %17 = sbr.rel (%p15) target = $region8
  $region5: #{up_forward.1} parent=0 // loop_body
    %s19 = ssub.s32 %s14, 1
    %s20 = ssub.s32 %s14, 2
    %s21 = sadd.s32 %s14, 1
    %s22 = ssub.s32 %s14, %s21
    %p23 = scmp.eq.s32.totalorder %s22, 0
    %s25 = sadd.s32 %s24, 1
    %s26 = scalar_select %p23, %s24, %s25
    %p29 = pneg %p23
    %p30 = scmp.eq.s32.totalorder %s14, 1
    %p31 = por %p29, %p30
    %p32 = scmp.ne.s32.totalorder %s24, %s27
    %p33 = scmp.eq.s32.totalorder %s14, 0
    %p34 = por %p32, %p33
    %p35 = scmp.ne.s32.totalorder %s24, %s27
    %p36 = scmp.eq.s32.totalorder %s19, 1
    %p37 = por %p35, %p36
    %p38 = scmp.ne.s32.totalorder %s27, %s28
    %p39 = scmp.eq.s32.totalorder %s19, 0
    %p40 = por %p38, %p39
    %p41 = scmp.ne.s32.totalorder %s27, %s28
    %p42 = scmp.eq.s32.totalorder %s20, 1
    %p43 = por %p41, %p42
    %p45 = scmp.ne.s32.totalorder %s28, %s44
    %p46 = scmp.eq.s32.totalorder %s20, 0
    %p47 = por %p45, %p46
    %s49 = sadd.s32 %s48, 1
    %p52 = scmp.eq.s32.totalorder %s14, 1
    %p53 = scmp.ne.s32.totalorder %s48, %s50
    %p54 = scmp.eq.s32.totalorder %s14, 0
    %p55 = por %p53, %p54
    %p56 = scmp.ne.s32.totalorder %s48, %s50
    %p57 = scmp.eq.s32.totalorder %s19, 1
    %p58 = por %p56, %p57
    %p59 = scmp.ne.s32.totalorder %s50, %s51
    %p60 = scmp.eq.s32.totalorder %s19, 0
    %p61 = por %p59, %p60
    %p62 = scmp.ne.s32.totalorder %s50, %s51
    %p63 = scmp.eq.s32.totalorder %s20, 1
    %p64 = por %p62, %p63
    %p66 = scmp.ne.s32.totalorder %s51, %s65
    %p67 = scmp.eq.s32.totalorder %s20, 0
    %p68 = por %p66, %p67
    %s70 = sadd.s32 %s69, 1
    %p73 = scmp.eq.s32.totalorder %s14, 1
    %p74 = scmp.ne.s32.totalorder %s69, %s71
    %p75 = scmp.eq.s32.totalorder %s14, 0
    %p76 = por %p74, %p75
    %p77 = scmp.ne.s32.totalorder %s69, %s71
    %p78 = scmp.eq.s32.totalorder %s19, 1
    %p79 = por %p77, %p78
    %p80 = scmp.ne.s32.totalorder %s71, %s72
    %p81 = scmp.eq.s32.totalorder %s19, 0
    %p82 = por %p80, %p81
    %p83 = scmp.ne.s32.totalorder %s71, %s72
    %p84 = scmp.eq.s32.totalorder %s20, 1
    %p85 = por %p83, %p84
    %p87 = scmp.ne.s32.totalorder %s72, %s86
    %p88 = scmp.eq.s32.totalorder %s20, 0
    %p89 = por %p87, %p88
    %s91 = sadd.s32 %s90, 1
    %p94 = scmp.eq.s32.totalorder %s14, 1
    %p95 = scmp.ne.s32.totalorder %s90, %s92
    %p96 = scmp.eq.s32.totalorder %s14, 0
    %p97 = por %p95, %p96
    %p98 = scmp.ne.s32.totalorder %s90, %s92
    %p99 = scmp.eq.s32.totalorder %s19, 1
    %p100 = por %p98, %p99
    %p101 = scmp.ne.s32.totalorder %s92, %s93
    %p102 = scmp.eq.s32.totalorder %s19, 0
    %p103 = por %p101, %p102
    %p104 = scmp.ne.s32.totalorder %s92, %s93
    %p105 = scmp.eq.s32.totalorder %s20, 1
    %p106 = por %p104, %p105
    %p108 = scmp.ne.s32.totalorder %s93, %s107
    %p109 = scmp.eq.s32.totalorder %s20, 0
    %p110 = por %p108, %p109
    %s112 = sadd.s32 %s111, 1
    %p115 = scmp.eq.s32.totalorder %s14, 1
    %p116 = scmp.ne.s32.totalorder %s111, %s113
    %p117 = scmp.eq.s32.totalorder %s14, 0
    %p118 = por %p116, %p117
    %p119 = scmp.ne.s32.totalorder %s111, %s113
    %p120 = scmp.eq.s32.totalorder %s19, 1
    %p121 = por %p119, %p120
    %p122 = scmp.ne.s32.totalorder %s113, %s114
    %p123 = scmp.eq.s32.totalorder %s19, 0
    %p124 = por %p122, %p123
    %p125 = scmp.ne.s32.totalorder %s113, %s114
    %p126 = scmp.eq.s32.totalorder %s20, 1
    %p127 = por %p125, %p126
    %p129 = scmp.ne.s32.totalorder %s114, %s128
    %p130 = scmp.eq.s32.totalorder %s20, 0
    %p131 = por %p129, %p130
    %s133 = sadd.s32 %s132, 1
    %p136 = scmp.eq.s32.totalorder %s14, 1
    %p137 = scmp.ne.s32.totalorder %s132, %s134
    %p138 = scmp.eq.s32.totalorder %s14, 0
    %p139 = por %p137, %p138
    %p140 = scmp.ne.s32.totalorder %s132, %s134
    %p141 = scmp.eq.s32.totalorder %s19, 1
    %p142 = por %p140, %p141
    %p143 = scmp.ne.s32.totalorder %s134, %s135
    %p144 = scmp.eq.s32.totalorder %s19, 0
    %p145 = por %p143, %p144
    %p146 = scmp.ne.s32.totalorder %s134, %s135
    %p147 = scmp.eq.s32.totalorder %s20, 1
    %p148 = por %p146, %p147
    %p150 = scmp.ne.s32.totalorder %s135, %s149
    %p151 = scmp.eq.s32.totalorder %s20, 0
    %p152 = por %p150, %p151
    %s154 = sadd.s32 %s153, 1
    %p157 = scmp.eq.s32.totalorder %s14, 1
    %p158 = scmp.ne.s32.totalorder %s153, %s155
    %p159 = scmp.eq.s32.totalorder %s14, 0
    %p160 = por %p158, %p159
    %p161 = scmp.ne.s32.totalorder %s153, %s155
    %p162 = scmp.eq.s32.totalorder %s19, 1
    %p163 = por %p161, %p162
    %p164 = scmp.ne.s32.totalorder %s155, %s156
    %p165 = scmp.eq.s32.totalorder %s19, 0
    %p166 = por %p164, %p165
    %p167 = scmp.ne.s32.totalorder %s155, %s156
    %p168 = scmp.eq.s32.totalorder %s20, 1
    %p169 = por %p167, %p168
    %p171 = scmp.ne.s32.totalorder %s156, %s170
    %p172 = scmp.eq.s32.totalorder %s20, 0
    %p173 = por %p171, %p172
    %s175 = sadd.s32 %s174, 1
    %p178 = scmp.eq.s32.totalorder %s14, 1
    %p179 = scmp.ne.s32.totalorder %s174, %s176
    %p180 = scmp.eq.s32.totalorder %s14, 0
    %p181 = por %p179, %p180
    %p182 = scmp.ne.s32.totalorder %s174, %s176
    %p183 = scmp.eq.s32.totalorder %s19, 1
    %p184 = por %p182, %p183
    %p185 = scmp.ne.s32.totalorder %s176, %s177
    %p186 = scmp.eq.s32.totalorder %s19, 0
    %p187 = por %p185, %p186
    %p188 = scmp.ne.s32.totalorder %s176, %s177
    %p189 = scmp.eq.s32.totalorder %s20, 1
    %p190 = por %p188, %p189
    %p192 = scmp.ne.s32.totalorder %s177, %s191
    %p193 = scmp.eq.s32.totalorder %s20, 0
    %p194 = por %p192, %p193
    %s195 = ssub.s32 %s14, %s21
    %p196 = scmp.eq.s32.totalorder %s195, 0
    %s198 = sadd.s32 %s197, 1
    %s199 = scalar_select %p196, %s197, %s198
    %p202 = pneg %p196
    %p203 = scmp.eq.s32.totalorder %s14, 1
    %p204 = por %p202, %p203
    %p205 = scmp.ne.s32.totalorder %s197, %s200
    %p206 = scmp.eq.s32.totalorder %s14, 0
    %p207 = por %p205, %p206
    %p208 = scmp.ne.s32.totalorder %s197, %s200
    %p209 = scmp.eq.s32.totalorder %s19, 1
    %p210 = por %p208, %p209
    %p211 = scmp.ne.s32.totalorder %s200, %s201
    %p212 = scmp.eq.s32.totalorder %s19, 0
    %p213 = por %p211, %p212
    %p214 = scmp.ne.s32.totalorder %s200, %s201
    %p215 = scmp.eq.s32.totalorder %s20, 1
    %p216 = por %p214, %p215
    %p218 = scmp.ne.s32.totalorder %s201, %s217
    %p219 = scmp.eq.s32.totalorder %s20, 0
    %p220 = por %p218, %p219
    %p221 = scmp.le.s32.totalorder 1, %s14
    %p222 = scmp.lt.s32.totalorder %s14, 3
    %p223 = pnand %p221, %p222
    %p224 = pneg %p223
    // Predicated region
    $region9: #{up_forward.1} parent=5 // pred_check
      _
    $region10: #{up_forward.1} parent=5 // pred_check_branch
      %226 = sbr.rel (%p223) target = $region12
    $region11: #{up_forward.1} parent=5 // pred_region
      %s227 = ssub.s32 %s14, 1
      // Predicated region
      $region13: #{up_forward.1} parent=11 // pred_check
        %p228 = pneg %p61
      $region14: #{up_forward.1} parent=11 // pred_check_branch
        %230 = sbr.rel (%p228) target = $region16
      $region15: #{up_forward.1} parent=11 // pred_region
        _
      $region16: #{up_forward.1} parent=11 // pred_fallthru
        _
      // Predicated region
      $region17: #{up_forward.1} parent=11 // pred_check
        %p231 = pneg %p82
      $region18: #{up_forward.1} parent=11 // pred_check_branch
        %233 = sbr.rel (%p231) target = $region20
      $region19: #{up_forward.1} parent=11 // pred_region
        _
      $region20: #{up_forward.1} parent=11 // pred_fallthru
        _
      // Predicated region
      $region21: #{up_forward.1} parent=11 // pred_check
        %p234 = pneg %p103
      $region22: #{up_forward.1} parent=11 // pred_check_branch
        %236 = sbr.rel (%p234) target = $region24
      $region23: #{up_forward.1} parent=11 // pred_region
        _
      $region24: #{up_forward.1} parent=11 // pred_fallthru
        _
      // Predicated region
      $region25: #{up_forward.1} parent=11 // pred_check
        %p237 = pneg %p124
      $region26: #{up_forward.1} parent=11 // pred_check_branch
        %239 = sbr.rel (%p237) target = $region28
      $region27: #{up_forward.1} parent=11 // pred_region
        _
      $region28: #{up_forward.1} parent=11 // pred_fallthru
        _
      // Predicated region
      $region29: #{up_forward.1} parent=11 // pred_check
        %p240 = pneg %p145
      $region30: #{up_forward.1} parent=11 // pred_check_branch
        %242 = sbr.rel (%p240) target = $region32
      $region31: #{up_forward.1} parent=11 // pred_region
        _
      $region32: #{up_forward.1} parent=11 // pred_fallthru
        _
      // Predicated region
      $region33: #{up_forward.1} parent=11 // pred_check
        %p243 = pneg %p166
      $region34: #{up_forward.1} parent=11 // pred_check_branch
        %245 = sbr.rel (%p243) target = $region36
      $region35: #{up_forward.1} parent=11 // pred_region
        _
      $region36: #{up_forward.1} parent=11 // pred_fallthru
        _
      // Predicated region
      $region37: #{up_forward.1} parent=11 // pred_check
        %p246 = pneg %p187
      $region38: #{up_forward.1} parent=11 // pred_check_branch
        %248 = sbr.rel (%p246) target = $region40
      $region39: #{up_forward.1} parent=11 // pred_region
        _
      $region40: #{up_forward.1} parent=11 // pred_fallthru
        _
    $region12: #{up_forward.1} parent=5 // pred_fallthru
      _
    %p249 = scmp.lt.s32.totalorder %s14, 2
    // Predicated region
    $region41: #{up_forward.1} parent=5 // pred_check
      %p250 = pneg %p249
    $region42: #{up_forward.1} parent=5 // pred_check_branch
      %252 = sbr.rel (%p250) target = $region44
    $region43: #{up_forward.1} parent=5 // pred_region
      // Predicated region
      $region45: #{up_forward.1} parent=43 // pred_check
        %p253 = pneg %p34
      $region46: #{up_forward.1} parent=43 // pred_check_branch
        %255 = sbr.rel (%p253) target = $region48
      $region47: #{up_forward.1} parent=43 // pred_region
        %p256 = scmp.lt.s32.totalorder %s14, 1
        %s257 = scalar_select %p256, %s14, 1
        %s258 = smul.addr %s257, 5
        %s259 = smul.addr %s258, 4
        %s260 = scalar_lea.vmem %s0, %s259
      $region48: #{up_forward.1} parent=43 // pred_fallthru
        _
    $region44: #{up_forward.1} parent=5 // pred_fallthru
      _
    %p261 = scmp.le.s32.totalorder 1, %s14
    %p262 = scmp.lt.s32.totalorder %s14, 3
    %p263 = pnand %p261, %p262
    %p264 = pneg %p263
    // Predicated region
    $region49: #{up_forward.1} parent=5 // pred_check
      _
    $region50: #{up_forward.1} parent=5 // pred_check_branch
      %266 = sbr.rel (%p263) target = $region52
    $region51: #{up_forward.1} parent=5 // pred_region
      %s267 = ssub.s32 %s14, 1
      %p268 = scmp.lt.s32.totalorder %s19, 1
      %s269 = scalar_select %p268, %s19, 1
      %s270 = smul.addr %s269, 5
      %s271 = smul.addr %s270, 4
      %s272 = scalar_lea.vmem %s0, %s271
      %p273 = pneg %p40
      %p274 = pneg %p37
      %p275 = pneg %p61
      %p276 = pneg %p58
      %p277 = pneg %p82
      %p278 = pneg %p79
      %p279 = pneg %p103
      %p280 = pneg %p100
      %p281 = pneg %p124
      %p282 = pneg %p121
      %p283 = pneg %p145
      %p284 = pneg %p142
      %p285 = pneg %p166
      %p286 = pneg %p163
      %p287 = pneg %p187
      %p288 = pneg %p184
      %p289 = pneg %p213
      %p290 = pneg %p210
      %p291 = scmp.lt.s32.totalorder %s19, 1
      %s292 = scalar_select %p291, %s19, 1
      %s293 = smul.addr %s292, 3
      %s294 = smul.addr %s293, 4
      %s295 = scalar_lea.vmem %s8, %s294
      %p296 = scmp.lt.s32.totalorder %s19, 1
      %s297 = scalar_select %p296, %s19, 1
      %s298 = smul.addr %s297, 5
      %s299 = smul.addr %s298, 4
      %s300 = scalar_lea.vmem %s0, %s299
      %p301 = scmp.lt.s32.totalorder %s19, 1
      %s302 = scalar_select %p301, %s19, 1
      %s303 = smul.addr %s302, 3
      %s304 = smul.addr %s303, 4
      %s305 = scalar_lea.vmem %s8, %s304
      %v307 = vld [vmem:[%s2] sm:$0x3]
      %v308 = vld [vmem:[%s300] sm:$0xff]
      %v309 = vld [vmem:[%s300 + $0x8] sm:$0xff]
      %s310 = scalar_lea.vmem %s2, 2
      %v311 = vld [vmem:[%s310] sm:$0x3]
      %v314 = vunpack.c.l.b16 %v308
      %v315 = vunpack.c.h.b16 %v308
      %v316 = vunpack.c.l.b16 %v309
      %v317 = vunpack.c.h.b16 %v309
      %v318 = vpack.c.b16 %v314, %v314
      %v319 = vpack.c.b16 %v315, %v315
      %v320 = vpack.c.b16 %v316, %v316
      %v321 = vpack.c.b16 %v317, %v317
      %322 = vrot.lane.b32.xlu0 %v318, 18
      %v323 = vpop.permute.xlu0 %322
      %324 = vrot.lane.b32.xlu0 %v319, 18
      %v325 = vpop.permute.xlu0 %324
      %326 = vrot.lane.b32.xlu0 %v320, 18
      %v327 = vpop.permute.xlu0 %326
      %328 = vrot.lane.b32.xlu0 %v321, 18
      %v329 = vpop.permute.xlu0 %328
      %vm330 = vcmask 146432
      %v331 = vsel %vm330, %v323, %v325
      %v332 = vsel %vm330, %v325, %v327
      %v333 = vsel %vm330, %v327, %v329
      %vm334 = vcmask 64512
      %v336 = vsel %vm334, %v311, 0
      %vm338 = vcmask 1043456
      %v340 = vsel %vm338, %v331, 0
      %v343 = vsel %vm338, %v332, 0
      %v346 = vsel %vm338, %v333, 0
      %348 = vmatprep.subr.bf16.mxu0 %v343
      %349 = vmatpush1.bf16.msra.mxu0 %v340
      %350 = vmatprep.subr.bf16.mxu0 0
      %351 = vmatpush1.bf16.msra.mxu0 0
      %352 = vmatprep.subr.bf16.mxu0 0
      %353 = vmatpush1.bf16.msra.mxu0 0
      %354 = vmatprep.subr.bf16.mxu0 0
      %355 = vmatpush1.bf16.msra.mxu0 0
      %356 = vmatprep.subr.bf16.mxu0 0
      %357 = vmatpush1.bf16.msra.mxu0 0
      %358 = vmatprep.subr.bf16.mxu0 0
      %359 = vmatpush1.bf16.msra.mxu0 0
      %360 = vmatprep.subr.bf16.mxu0 0
      %361 = vmatpush1.bf16.msra.mxu0 0
      %362 = vmatprep.subr.bf16.mxu0 0
      %363 = vmatpush1.bf16.msra.mxu0 0
      %364 = vmatprep.subr.bf16.mxu0 0
      %365 = vmatpush1.bf16.msra.mxu0 0
      %366 = vmatprep.subr.bf16.mxu0 0
      %367 = vmatpush1.bf16.msra.mxu0 0
      %368 = vmatprep.subr.bf16.mxu0 0
      %369 = vmatpush1.bf16.msra.mxu0 0
      %370 = vmatprep.subr.bf16.mxu0 0
      %371 = vmatpush1.bf16.msra.mxu0 0
      %372 = vmatprep.subr.bf16.mxu0 0
      %373 = vmatpush1.bf16.msra.mxu0 0
      %374 = vmatprep.subr.bf16.mxu0 0
      %375 = vmatpush1.bf16.msra.mxu0 0
      %376 = vmatprep.subr.bf16.mxu0 0
      %377 = vmatpush1.bf16.msra.mxu0 0
      %378 = vmatprep.subr.bf16.mxu0 0
      %379 = vmatpush1.bf16.msra.mxu0 0
      %380 = vmatprep.mubr.bf16.mxu0 0
      %381 = vmatmul.mubr.bf16.gmra.mrb[0].mxu0 %v336
      %v382 = vpop.f32.mrb[0].mxu0
      %v383 = vadd.f32 0.0, %v382
      %v384 = vpop.f32.mrb[0].mxu0
      %v385 = vadd.f32 0.0, %v384
      %v386 = vpop.f32.mrb[0].mxu0
      %v387 = vpop.f32.mrb[0].mxu0
      %388 = vdwg.mxu0
      %389 = vmatprep.subr.bf16.mxu0 0
      %390 = vmatpush1.bf16.msra.mxu0 %v346
      %391 = vmatprep.subr.bf16.mxu0 0
      %392 = vmatpush1.bf16.msra.mxu0 0
      %393 = vmatprep.subr.bf16.mxu0 0
      %394 = vmatpush1.bf16.msra.mxu0 0
      %395 = vmatprep.subr.bf16.mxu0 0
      %396 = vmatpush1.bf16.msra.mxu0 0
      %397 = vmatprep.subr.bf16.mxu0 0
      %398 = vmatpush1.bf16.msra.mxu0 0
      %399 = vmatprep.subr.bf16.mxu0 0
      %400 = vmatpush1.bf16.msra.mxu0 0
      %401 = vmatprep.subr.bf16.mxu0 0
      %402 = vmatpush1.bf16.msra.mxu0 0
      %403 = vmatprep.subr.bf16.mxu0 0
      %404 = vmatpush1.bf16.msra.mxu0 0
      %405 = vmatprep.subr.bf16.mxu0 0
      %406 = vmatpush1.bf16.msra.mxu0 0
      %407 = vmatprep.subr.bf16.mxu0 0
      %408 = vmatpush1.bf16.msra.mxu0 0
      %409 = vmatprep.subr.bf16.mxu0 0
      %410 = vmatpush1.bf16.msra.mxu0 0
      %411 = vmatprep.subr.bf16.mxu0 0
      %412 = vmatpush1.bf16.msra.mxu0 0
      %413 = vmatprep.subr.bf16.mxu0 0
      %414 = vmatpush1.bf16.msra.mxu0 0
      %415 = vmatprep.subr.bf16.mxu0 0
      %416 = vmatpush1.bf16.msra.mxu0 0
      %417 = vmatprep.subr.bf16.mxu0 0
      %418 = vmatpush1.bf16.msra.mxu0 0
      %419 = vmatprep.subr.bf16.mxu0 0
      %420 = vmatpush1.bf16.msra.mxu0 0
      %421 = vmatprep.mubr.bf16.mxu0 0
      %422 = vmatmul.mubr.bf16.gmra.mrb[0].mxu0 %v336
      %v423 = vpop.f32.mrb[0].mxu0
      %v424 = vadd.f32 0.0, %v423
      %v425 = vpop.f32.mrb[0].mxu0
      %v426 = vpop.f32.mrb[0].mxu0
      %v427 = vpop.f32.mrb[0].mxu0
      %428 = vdwg.mxu0
      %429 = vrot.lane.b32.xlu0 %v318, 19
      %v430 = vpop.permute.xlu0 %429
      %431 = vrot.lane.b32.xlu0 %v319, 19
      %v432 = vpop.permute.xlu0 %431
      %433 = vrot.lane.b32.xlu0 %v320, 19
      %v434 = vpop.permute.xlu0 %433
      %435 = vrot.lane.b32.xlu0 %v321, 19
      %v436 = vpop.permute.xlu0 %435
      %vm437 = vcmask 154624
      %v438 = vsel %vm437, %v430, %v432
      %v439 = vsel %vm437, %v432, %v434
      %v440 = vsel %vm437, %v434, %v436
      %v442 = vsel %vm334, %v307, 0
      %v445 = vsel %vm338, %v438, 0
      %v448 = vsel %vm338, %v439, 0
      %v451 = vsel %vm338, %v440, 0
      %453 = vmatprep.subr.bf16.mxu0 %v448
      %454 = vmatpush1.bf16.msra.mxu0 %v445
      %455 = vmatprep.subr.bf16.mxu0 0
      %456 = vmatpush1.bf16.msra.mxu0 0
      %457 = vmatprep.subr.bf16.mxu0 0
      %458 = vmatpush1.bf16.msra.mxu0 0
      %459 = vmatprep.subr.bf16.mxu0 0
      %460 = vmatpush1.bf16.msra.mxu0 0
      %461 = vmatprep.subr.bf16.mxu0 0
      %462 = vmatpush1.bf16.msra.mxu0 0
      %463 = vmatprep.subr.bf16.mxu0 0
      %464 = vmatpush1.bf16.msra.mxu0 0
      %465 = vmatprep.subr.bf16.mxu0 0
      %466 = vmatpush1.bf16.msra.mxu0 0
      %467 = vmatprep.subr.bf16.mxu0 0
      %468 = vmatpush1.bf16.msra.mxu0 0
      %469 = vmatprep.subr.bf16.mxu0 0
      %470 = vmatpush1.bf16.msra.mxu0 0
      %471 = vmatprep.subr.bf16.mxu0 0
      %472 = vmatpush1.bf16.msra.mxu0 0
      %473 = vmatprep.subr.bf16.mxu0 0
      %474 = vmatpush1.bf16.msra.mxu0 0
      %475 = vmatprep.subr.bf16.mxu0 0
      %476 = vmatpush1.bf16.msra.mxu0 0
      %477 = vmatprep.subr.bf16.mxu0 0
      %478 = vmatpush1.bf16.msra.mxu0 0
      %479 = vmatprep.subr.bf16.mxu0 0
      %480 = vmatpush1.bf16.msra.mxu0 0
      %481 = vmatprep.subr.bf16.mxu0 0
      %482 = vmatpush1.bf16.msra.mxu0 0
      %483 = vmatprep.subr.bf16.mxu0 0
      %484 = vmatpush1.bf16.msra.mxu0 0
      %485 = vmatprep.mubr.bf16.mxu0 0
      %486 = vmatmul.mubr.bf16.gmra.mrb[0].mxu0 %v442
      %v487 = vpop.f32.mrb[0].mxu0
      %v488 = vadd.f32 %v383, %v487
      %v489 = vpop.f32.mrb[0].mxu0
      %v490 = vadd.f32 %v385, %v489
      %v491 = vpop.f32.mrb[0].mxu0
      %v492 = vpop.f32.mrb[0].mxu0
      %493 = vdwg.mxu0
      %494 = vmatprep.subr.bf16.mxu0 0
      %495 = vmatpush1.bf16.msra.mxu0 %v451
      %496 = vmatprep.subr.bf16.mxu0 0
      %497 = vmatpush1.bf16.msra.mxu0 0
      %498 = vmatprep.subr.bf16.mxu0 0
      %499 = vmatpush1.bf16.msra.mxu0 0
      %500 = vmatprep.subr.bf16.mxu0 0
      %501 = vmatpush1.bf16.msra.mxu0 0
      %502 = vmatprep.subr.bf16.mxu0 0
      %503 = vmatpush1.bf16.msra.mxu0 0
      %504 = vmatprep.subr.bf16.mxu0 0
      %505 = vmatpush1.bf16.msra.mxu0 0
      %506 = vmatprep.subr.bf16.mxu0 0
      %507 = vmatpush1.bf16.msra.mxu0 0
      %508 = vmatprep.subr.bf16.mxu0 0
      %509 = vmatpush1.bf16.msra.mxu0 0
      %510 = vmatprep.subr.bf16.mxu0 0
      %511 = vmatpush1.bf16.msra.mxu0 0
      %512 = vmatprep.subr.bf16.mxu0 0
      %513 = vmatpush1.bf16.msra.mxu0 0
      %514 = vmatprep.subr.bf16.mxu0 0
      %515 = vmatpush1.bf16.msra.mxu0 0
      %516 = vmatprep.subr.bf16.mxu0 0
      %517 = vmatpush1.bf16.msra.mxu0 0
      %518 = vmatprep.subr.bf16.mxu0 0
      %519 = vmatpush1.bf16.msra.mxu0 0
      %520 = vmatprep.subr.bf16.mxu0 0
      %521 = vmatpush1.bf16.msra.mxu0 0
      %522 = vmatprep.subr.bf16.mxu0 0
      %523 = vmatpush1.bf16.msra.mxu0 0
      %524 = vmatprep.subr.bf16.mxu0 0
      %525 = vmatpush1.bf16.msra.mxu0 0
      %526 = vmatprep.mubr.bf16.mxu0 0
      %527 = vmatmul.mubr.bf16.gmra.mrb[0].mxu0 %v442
      %v528 = vpop.f32.mrb[0].mxu0
      %v529 = vadd.f32 %v424, %v528
      %v530 = vpop.f32.mrb[0].mxu0
      %v531 = vpop.f32.mrb[0].mxu0
      %v532 = vpop.f32.mrb[0].mxu0
      %533 = vdwg.mxu0
      %s534 = scalar_lea.vmem %s2, 4
      %v535 = vld [vmem:[%s534] sm:$0x3]
      %536 = vrot.lane.b32.xlu0 %v318, 17
      %v537 = vpop.permute.xlu0 %536
      %538 = vrot.lane.b32.xlu0 %v319, 17
      %v539 = vpop.permute.xlu0 %538
      %540 = vrot.lane.b32.xlu0 %v320, 17
      %v541 = vpop.permute.xlu0 %540
      %542 = vrot.lane.b32.xlu0 %v321, 17
      %v543 = vpop.permute.xlu0 %542
      %vm544 = vcmask 138240
      %v545 = vsel %vm544, %v537, %v539
      %v546 = vsel %vm544, %v539, %v541
      %v547 = vsel %vm544, %v541, %v543
      %v549 = vsel %vm334, %v535, 0
      %v552 = vsel %vm338, %v545, 0
      %v555 = vsel %vm338, %v546, 0
      %v558 = vsel %vm338, %v547, 0
      %560 = vmatprep.subr.bf16.mxu0 %v555
      %561 = vmatpush1.bf16.msra.mxu0 %v552
      %562 = vmatprep.subr.bf16.mxu0 0
      %563 = vmatpush1.bf16.msra.mxu0 0
      %564 = vmatprep.subr.bf16.mxu0 0
      %565 = vmatpush1.bf16.msra.mxu0 0
      %566 = vmatprep.subr.bf16.mxu0 0
      %567 = vmatpush1.bf16.msra.mxu0 0
      %568 = vmatprep.subr.bf16.mxu0 0
      %569 = vmatpush1.bf16.msra.mxu0 0
      %570 = vmatprep.subr.bf16.mxu0 0
      %571 = vmatpush1.bf16.msra.mxu0 0
      %572 = vmatprep.subr.bf16.mxu0 0
      %573 = vmatpush1.bf16.msra.mxu0 0
      %574 = vmatprep.subr.bf16.mxu0 0
      %575 = vmatpush1.bf16.msra.mxu0 0
      %576 = vmatprep.subr.bf16.mxu0 0
      %577 = vmatpush1.bf16.msra.mxu0 0
      %578 = vmatprep.subr.bf16.mxu0 0
      %579 = vmatpush1.bf16.msra.mxu0 0
      %580 = vmatprep.subr.bf16.mxu0 0
      %581 = vmatpush1.bf16.msra.mxu0 0
      %582 = vmatprep.subr.bf16.mxu0 0
      %583 = vmatpush1.bf16.msra.mxu0 0
      %584 = vmatprep.subr.bf16.mxu0 0
      %585 = vmatpush1.bf16.msra.mxu0 0
      %586 = vmatprep.subr.bf16.mxu0 0
      %587 = vmatpush1.bf16.msra.mxu0 0
      %588 = vmatprep.subr.bf16.mxu0 0
      %589 = vmatpush1.bf16.msra.mxu0 0
      %590 = vmatprep.subr.bf16.mxu0 0
      %591 = vmatpush1.bf16.msra.mxu0 0
      %592 = vmatprep.mubr.bf16.mxu0 0
      %593 = vmatmul.mubr.bf16.gmra.mrb[0].mxu0 %v549
      %v594 = vpop.f32.mrb[0].mxu0
      %v595 = vadd.f32 0.0, %v594
      %v596 = vpop.f32.mrb[0].mxu0
      %v597 = vadd.f32 0.0, %v596
      %v598 = vpop.f32.mrb[0].mxu0
      %v599 = vpop.f32.mrb[0].mxu0
      %600 = vdwg.mxu0
      %601 = vmatprep.subr.bf16.mxu0 0
      %602 = vmatpush1.bf16.msra.mxu0 %v558
      %603 = vmatprep.subr.bf16.mxu0 0
      %604 = vmatpush1.bf16.msra.mxu0 0
      %605 = vmatprep.subr.bf16.mxu0 0
      %606 = vmatpush1.bf16.msra.mxu0 0
      %607 = vmatprep.subr.bf16.mxu0 0
      %608 = vmatpush1.bf16.msra.mxu0 0
      %609 = vmatprep.subr.bf16.mxu0 0
      %610 = vmatpush1.bf16.msra.mxu0 0
      %611 = vmatprep.subr.bf16.mxu0 0
      %612 = vmatpush1.bf16.msra.mxu0 0
      %613 = vmatprep.subr.bf16.mxu0 0
      %614 = vmatpush1.bf16.msra.mxu0 0
      %615 = vmatprep.subr.bf16.mxu0 0
      %616 = vmatpush1.bf16.msra.mxu0 0
      %617 = vmatprep.subr.bf16.mxu0 0
      %618 = vmatpush1.bf16.msra.mxu0 0
      %619 = vmatprep.subr.bf16.mxu0 0
      %620 = vmatpush1.bf16.msra.mxu0 0
      %621 = vmatprep.subr.bf16.mxu0 0
      %622 = vmatpush1.bf16.msra.mxu0 0
      %623 = vmatprep.subr.bf16.mxu0 0
      %624 = vmatpush1.bf16.msra.mxu0 0
      %625 = vmatprep.subr.bf16.mxu0 0
      %626 = vmatpush1.bf16.msra.mxu0 0
      %627 = vmatprep.subr.bf16.mxu0 0
      %628 = vmatpush1.bf16.msra.mxu0 0
      %629 = vmatprep.subr.bf16.mxu0 0
      %630 = vmatpush1.bf16.msra.mxu0 0
      %631 = vmatprep.subr.bf16.mxu0 0
      %632 = vmatpush1.bf16.msra.mxu0 0
      %633 = vmatprep.mubr.bf16.mxu0 0
      %634 = vmatmul.mubr.bf16.gmra.mrb[0].mxu0 %v549
      %v635 = vpop.f32.mrb[0].mxu0
      %v636 = vadd.f32 0.0, %v635
      %v637 = vpop.f32.mrb[0].mxu0
      %v638 = vpop.f32.mrb[0].mxu0
      %v639 = vpop.f32.mrb[0].mxu0
      %640 = vdwg.mxu0
      %v641 = vadd.f32 %v488, %v595
      %v642 = vadd.f32 %v490, %v597
      %v643 = vadd.f32 %v529, %v636
      %s644 = scalar_lea.vmem %s2, 6
      %v645 = vld [vmem:[%s644] sm:$0x3]
      %646 = vrot.lane.b32.xlu0 %v318, 1
      %v647 = vpop.permute.xlu0 %646
      %648 = vrot.lane.b32.xlu0 %v319, 1
      %v649 = vpop.permute.xlu0 %648
      %650 = vrot.lane.b32.xlu0 %v320, 1
      %v651 = vpop.permute.xlu0 %650
      %652 = vrot.lane.b32.xlu0 %v321, 1
      %v653 = vpop.permute.xlu0 %652
      %vm654 = vcmask 7168
      %v655 = vsel %vm654, %v647, %v649
      %v656 = vsel %vm654, %v649, %v651
      %v657 = vsel %vm654, %v651, %v653
      %v659 = vsel %vm334, %v645, 0
      %v662 = vsel %vm338, %v655, 0
      %v665 = vsel %vm338, %v656, 0
      %v668 = vsel %vm338, %v657, 0
      %670 = vmatprep.subr.bf16.mxu0 %v665
      %671 = vmatpush1.bf16.msra.mxu0 %v662
      %672 = vmatprep.subr.bf16.mxu0 0
      %673 = vmatpush1.bf16.msra.mxu0 0
      %674 = vmatprep.subr.bf16.mxu0 0
      %675 = vmatpush1.bf16.msra.mxu0 0
      %676 = vmatprep.subr.bf16.mxu0 0
      %677 = vmatpush1.bf16.msra.mxu0 0
      %678 = vmatprep.subr.bf16.mxu0 0
      %679 = vmatpush1.bf16.msra.mxu0 0
      %680 = vmatprep.subr.bf16.mxu0 0
      %681 = vmatpush1.bf16.msra.mxu0 0
      %682 = vmatprep.subr.bf16.mxu0 0
      %683 = vmatpush1.bf16.msra.mxu0 0
      %684 = vmatprep.subr.bf16.mxu0 0
      %685 = vmatpush1.bf16.msra.mxu0 0
      %686 = vmatprep.subr.bf16.mxu0 0
      %687 = vmatpush1.bf16.msra.mxu0 0
      %688 = vmatprep.subr.bf16.mxu0 0
      %689 = vmatpush1.bf16.msra.mxu0 0
      %690 = vmatprep.subr.bf16.mxu0 0
      %691 = vmatpush1.bf16.msra.mxu0 0
      %692 = vmatprep.subr.bf16.mxu0 0
      %693 = vmatpush1.bf16.msra.mxu0 0
      %694 = vmatprep.subr.bf16.mxu0 0
      %695 = vmatpush1.bf16.msra.mxu0 0
      %696 = vmatprep.subr.bf16.mxu0 0
      %697 = vmatpush1.bf16.msra.mxu0 0
      %698 = vmatprep.subr.bf16.mxu0 0
      %699 = vmatpush1.bf16.msra.mxu0 0
      %700 = vmatprep.subr.bf16.mxu0 0
      %701 = vmatpush1.bf16.msra.mxu0 0
      %702 = vmatprep.mubr.bf16.mxu0 0
      %703 = vmatmul.mubr.bf16.gmra.mrb[0].mxu0 %v659
      %v704 = vpop.f32.mrb[0].mxu0
      %v705 = vadd.f32 0.0, %v704
      %v706 = vpop.f32.mrb[0].mxu0
      %v707 = vadd.f32 0.0, %v706
      %v708 = vpop.f32.mrb[0].mxu0
      %v709 = vpop.f32.mrb[0].mxu0
      %710 = vdwg.mxu0
      %711 = vmatprep.subr.bf16.mxu0 0
      %712 = vmatpush1.bf16.msra.mxu0 %v668
      %713 = vmatprep.subr.bf16.mxu0 0
      %714 = vmatpush1.bf16.msra.mxu0 0
      %715 = vmatprep.subr.bf16.mxu0 0
      %716 = vmatpush1.bf16.msra.mxu0 0
      %717 = vmatprep.subr.bf16.mxu0 0
      %718 = vmatpush1.bf16.msra.mxu0 0
      %719 = vmatprep.subr.bf16.mxu0 0
      %720 = vmatpush1.bf16.msra.mxu0 0
      %721 = vmatprep.subr.bf16.mxu0 0
      %722 = vmatpush1.bf16.msra.mxu0 0
      %723 = vmatprep.subr.bf16.mxu0 0
      %724 = vmatpush1.bf16.msra.mxu0 0
      %725 = vmatprep.subr.bf16.mxu0 0
      %726 = vmatpush1.bf16.msra.mxu0 0
      %727 = vmatprep.subr.bf16.mxu0 0
      %728 = vmatpush1.bf16.msra.mxu0 0
      %729 = vmatprep.subr.bf16.mxu0 0
      %730 = vmatpush1.bf16.msra.mxu0 0
      %731 = vmatprep.subr.bf16.mxu0 0
      %732 = vmatpush1.bf16.msra.mxu0 0
      %733 = vmatprep.subr.bf16.mxu0 0
      %734 = vmatpush1.bf16.msra.mxu0 0
      %735 = vmatprep.subr.bf16.mxu0 0
      %736 = vmatpush1.bf16.msra.mxu0 0
      %737 = vmatprep.subr.bf16.mxu0 0
      %738 = vmatpush1.bf16.msra.mxu0 0
      %739 = vmatprep.subr.bf16.mxu0 0
      %740 = vmatpush1.bf16.msra.mxu0 0
      %741 = vmatprep.subr.bf16.mxu0 0
      %742 = vmatpush1.bf16.msra.mxu0 0
      %743 = vmatprep.mubr.bf16.mxu0 0
      %744 = vmatmul.mubr.bf16.gmra.mrb[0].mxu0 %v659
      %v745 = vpop.f32.mrb[0].mxu0
      %v746 = vadd.f32 0.0, %v745
      %v747 = vpop.f32.mrb[0].mxu0
      %v748 = vpop.f32.mrb[0].mxu0
      %v749 = vpop.f32.mrb[0].mxu0
      %750 = vdwg.mxu0
      %v751 = vadd.f32 %v641, %v705
      %v752 = vadd.f32 %v642, %v707
      %v753 = vadd.f32 %v643, %v746
      %s754 = scalar_lea.vmem %s2, 8
      %v755 = vld [vmem:[%s754] sm:$0x3]
      %v756 = vld [vmem:[%s300 + $0x4] sm:$0xff]
      %v757 = vld [vmem:[%s300 + $0xc] sm:$0xf]
      %v760 = vunpack.c.l.b16 %v756
      %v761 = vunpack.c.h.b16 %v756
      %v762 = vunpack.c.l.b16 %v757
      %v763 = vpack.c.b16 %v760, %v760
      %v764 = vpack.c.b16 %v761, %v761
      %v765 = vpack.c.b16 %v762, %v762
      %v767 = vsel %vm334, %v755, 0
      %v770 = vsel %vm338, %v763, 0
      %v773 = vsel %vm338, %v764, 0
      %v776 = vsel %vm338, %v765, 0
      %778 = vmatprep.subr.bf16.mxu0 %v773
      %779 = vmatpush1.bf16.msra.mxu0 %v770
      %780 = vmatprep.subr.bf16.mxu0 0
      %781 = vmatpush1.bf16.msra.mxu0 0
      %782 = vmatprep.subr.bf16.mxu0 0
      %783 = vmatpush1.bf16.msra.mxu0 0
      %784 = vmatprep.subr.bf16.mxu0 0
      %785 = vmatpush1.bf16.msra.mxu0 0
      %786 = vmatprep.subr.bf16.mxu0 0
      %787 = vmatpush1.bf16.msra.mxu0 0
      %788 = vmatprep.subr.bf16.mxu0 0
      %789 = vmatpush1.bf16.msra.mxu0 0
      %790 = vmatprep.subr.bf16.mxu0 0
      %791 = vmatpush1.bf16.msra.mxu0 0
      %792 = vmatprep.subr.bf16.mxu0 0
      %793 = vmatpush1.bf16.msra.mxu0 0
      %794 = vmatprep.subr.bf16.mxu0 0
      %795 = vmatpush1.bf16.msra.mxu0 0
      %796 = vmatprep.subr.bf16.mxu0 0
      %797 = vmatpush1.bf16.msra.mxu0 0
      %798 = vmatprep.subr.bf16.mxu0 0
      %799 = vmatpush1.bf16.msra.mxu0 0
      %800 = vmatprep.subr.bf16.mxu0 0
      %801 = vmatpush1.bf16.msra.mxu0 0
      %802 = vmatprep.subr.bf16.mxu0 0
      %803 = vmatpush1.bf16.msra.mxu0 0
      %804 = vmatprep.subr.bf16.mxu0 0
      %805 = vmatpush1.bf16.msra.mxu0 0
      %806 = vmatprep.subr.bf16.mxu0 0
      %807 = vmatpush1.bf16.msra.mxu0 0
      %808 = vmatprep.subr.bf16.mxu0 0
      %809 = vmatpush1.bf16.msra.mxu0 0
      %810 = vmatprep.mubr.bf16.mxu0 0
      %811 = vmatmul.mubr.bf16.gmra.mrb[0].mxu0 %v767
      %v812 = vpop.f32.mrb[0].mxu0
      %v813 = vadd.f32 0.0, %v812
      %v814 = vpop.f32.mrb[0].mxu0
      %v815 = vadd.f32 0.0, %v814
      %v816 = vpop.f32.mrb[0].mxu0
      %v817 = vpop.f32.mrb[0].mxu0
      %818 = vdwg.mxu0
      %819 = vmatprep.subr.bf16.mxu0 0
      %820 = vmatpush1.bf16.msra.mxu0 %v776
      %821 = vmatprep.subr.bf16.mxu0 0
      %822 = vmatpush1.bf16.msra.mxu0 0
      %823 = vmatprep.subr.bf16.mxu0 0
      %824 = vmatpush1.bf16.msra.mxu0 0
      %825 = vmatprep.subr.bf16.mxu0 0
      %826 = vmatpush1.bf16.msra.mxu0 0
      %827 = vmatprep.subr.bf16.mxu0 0
      %828 = vmatpush1.bf16.msra.mxu0 0
      %829 = vmatprep.subr.bf16.mxu0 0
      %830 = vmatpush1.bf16.msra.mxu0 0
      %831 = vmatprep.subr.bf16.mxu0 0
      %832 = vmatpush1.bf16.msra.mxu0 0
      %833 = vmatprep.subr.bf16.mxu0 0
      %834 = vmatpush1.bf16.msra.mxu0 0
      %835 = vmatprep.subr.bf16.mxu0 0
      %836 = vmatpush1.bf16.msra.mxu0 0
      %837 = vmatprep.subr.bf16.mxu0 0
      %838 = vmatpush1.bf16.msra.mxu0 0
      %839 = vmatprep.subr.bf16.mxu0 0
      %840 = vmatpush1.bf16.msra.mxu0 0
      %841 = vmatprep.subr.bf16.mxu0 0
      %842 = vmatpush1.bf16.msra.mxu0 0
      %843 = vmatprep.subr.bf16.mxu0 0
      %844 = vmatpush1.bf16.msra.mxu0 0
      %845 = vmatprep.subr.bf16.mxu0 0
      %846 = vmatpush1.bf16.msra.mxu0 0
      %847 = vmatprep.subr.bf16.mxu0 0
      %848 = vmatpush1.bf16.msra.mxu0 0
      %849 = vmatprep.subr.bf16.mxu0 0
      %850 = vmatpush1.bf16.msra.mxu0 0
      %851 = vmatprep.mubr.bf16.mxu0 0
      %852 = vmatmul.mubr.bf16.gmra.mrb[0].mxu0 %v767
      %v853 = vpop.f32.mrb[0].mxu0
      %v854 = vadd.f32 0.0, %v853
      %v855 = vpop.f32.mrb[0].mxu0
      %v856 = vpop.f32.mrb[0].mxu0
      %v857 = vpop.f32.mrb[0].mxu0
      %858 = vdwg.mxu0
      %v859 = vadd.f32 %v751, %v813
      %v860 = vadd.f32 %v752, %v815
      %v861 = vadd.f32 %v753, %v854
      %s862 = scalar_lea.vmem %s2, 10
      %v863 = vld [vmem:[%s862] sm:$0x3]
      %v864 = vld [vmem:[%s300 + $0x4] sm:$0xff]
      %v865 = vld [vmem:[%s300 + $0xc] sm:$0xff]
      %v868 = vunpack.c.l.b16 %v864
      %v869 = vunpack.c.h.b16 %v864
      %v870 = vunpack.c.l.b16 %v865
      %v871 = vunpack.c.h.b16 %v865
      %v872 = vpack.c.b16 %v868, %v868
      %v873 = vpack.c.b16 %v869, %v869
      %v874 = vpack.c.b16 %v870, %v870
      %v875 = vpack.c.b16 %v871, %v871
      %876 = vrot.lane.b32.xlu0 %v872, 127
      %v877 = vpop.permute.xlu0 %876
      %878 = vrot.lane.b32.xlu0 %v873, 127
      %v879 = vpop.permute.xlu0 %878
      %880 = vrot.lane.b32.xlu0 %v874, 127
      %v881 = vpop.permute.xlu0 %880
      %882 = vrot.lane.b32.xlu0 %v875, 127
      %v883 = vpop.permute.xlu0 %882
      %vm884 = vcmask 1039360
      %v885 = vsel %vm884, %v877, %v879
      %v886 = vsel %vm884, %v879, %v881
      %v887 = vsel %vm884, %v881, %v883
      %v889 = vsel %vm334, %v863, 0
      %v892 = vsel %vm338, %v885, 0
      %v895 = vsel %vm338, %v886, 0
      %v898 = vsel %vm338, %v887, 0
      %900 = vmatprep.subr.bf16.mxu0 %v895
      %901 = vmatpush1.bf16.msra.mxu0 %v892
      %902 = vmatprep.subr.bf16.mxu0 0
      %903 = vmatpush1.bf16.msra.mxu0 0
      %904 = vmatprep.subr.bf16.mxu0 0
      %905 = vmatpush1.bf16.msra.mxu0 0
      %906 = vmatprep.subr.bf16.mxu0 0
      %907 = vmatpush1.bf16.msra.mxu0 0
      %908 = vmatprep.subr.bf16.mxu0 0
      %909 = vmatpush1.bf16.msra.mxu0 0
      %910 = vmatprep.subr.bf16.mxu0 0
      %911 = vmatpush1.bf16.msra.mxu0 0
      %912 = vmatprep.subr.bf16.mxu0 0
      %913 = vmatpush1.bf16.msra.mxu0 0
      %914 = vmatprep.subr.bf16.mxu0 0
      %915 = vmatpush1.bf16.msra.mxu0 0
      %916 = vmatprep.subr.bf16.mxu0 0
      %917 = vmatpush1.bf16.msra.mxu0 0
      %918 = vmatprep.subr.bf16.mxu0 0
      %919 = vmatpush1.bf16.msra.mxu0 0
      %920 = vmatprep.subr.bf16.mxu0 0
      %921 = vmatpush1.bf16.msra.mxu0 0
      %922 = vmatprep.subr.bf16.mxu0 0
      %923 = vmatpush1.bf16.msra.mxu0 0
      %924 = vmatprep.subr.bf16.mxu0 0
      %925 = vmatpush1.bf16.msra.mxu0 0
      %926 = vmatprep.subr.bf16.mxu0 0
      %927 = vmatpush1.bf16.msra.mxu0 0
      %928 = vmatprep.subr.bf16.mxu0 0
      %929 = vmatpush1.bf16.msra.mxu0 0
      %930 = vmatprep.subr.bf16.mxu0 0
      %931 = vmatpush1.bf16.msra.mxu0 0
      %932 = vmatprep.mubr.bf16.mxu0 0
      %933 = vmatmul.mubr.bf16.gmra.mrb[0].mxu0 %v889
      %v934 = vpop.f32.mrb[0].mxu0
      %v935 = vadd.f32 0.0, %v934
      %v936 = vpop.f32.mrb[0].mxu0
      %v937 = vadd.f32 0.0, %v936
      %v938 = vpop.f32.mrb[0].mxu0
      %v939 = vpop.f32.mrb[0].mxu0
      %940 = vdwg.mxu0
      %941 = vmatprep.subr.bf16.mxu0 0
      %942 = vmatpush1.bf16.msra.mxu0 %v898
      %943 = vmatprep.subr.bf16.mxu0 0
      %944 = vmatpush1.bf16.msra.mxu0 0
      %945 = vmatprep.subr.bf16.mxu0 0
      %946 = vmatpush1.bf16.msra.mxu0 0
      %947 = vmatprep.subr.bf16.mxu0 0
      %948 = vmatpush1.bf16.msra.mxu0 0
      %949 = vmatprep.subr.bf16.mxu0 0
      %950 = vmatpush1.bf16.msra.mxu0 0
      %951 = vmatprep.subr.bf16.mxu0 0
      %952 = vmatpush1.bf16.msra.mxu0 0
      %953 = vmatprep.subr.bf16.mxu0 0
      %954 = vmatpush1.bf16.msra.mxu0 0
      %955 = vmatprep.subr.bf16.mxu0 0
      %956 = vmatpush1.bf16.msra.mxu0 0
      %957 = vmatprep.subr.bf16.mxu0 0
      %958 = vmatpush1.bf16.msra.mxu0 0
      %959 = vmatprep.subr.bf16.mxu0 0
      %960 = vmatpush1.bf16.msra.mxu0 0
      %961 = vmatprep.subr.bf16.mxu0 0
      %962 = vmatpush1.bf16.msra.mxu0 0
      %963 = vmatprep.subr.bf16.mxu0 0
      %964 = vmatpush1.bf16.msra.mxu0 0
      %965 = vmatprep.subr.bf16.mxu0 0
      %966 = vmatpush1.bf16.msra.mxu0 0
      %967 = vmatprep.subr.bf16.mxu0 0
      %968 = vmatpush1.bf16.msra.mxu0 0
      %969 = vmatprep.subr.bf16.mxu0 0
      %970 = vmatpush1.bf16.msra.mxu0 0
      %971 = vmatprep.subr.bf16.mxu0 0
      %972 = vmatpush1.bf16.msra.mxu0 0
      %973 = vmatprep.mubr.bf16.mxu0 0
      %974 = vmatmul.mubr.bf16.gmra.mrb[0].mxu0 %v889
      %v975 = vpop.f32.mrb[0].mxu0
      %v976 = vadd.f32 0.0, %v975
      %v977 = vpop.f32.mrb[0].mxu0
      %v978 = vpop.f32.mrb[0].mxu0
      %v979 = vpop.f32.mrb[0].mxu0
      %980 = vdwg.mxu0
      %v981 = vadd.f32 %v859, %v935
      %v982 = vadd.f32 %v860, %v937
      %v983 = vadd.f32 %v861, %v976
      %s984 = scalar_lea.vmem %s2, 12
      %v985 = vld [vmem:[%s984] sm:$0x3]
      %986 = vrot.lane.b32.xlu0 %v872, 111
      %v987 = vpop.permute.xlu0 %986
      %988 = vrot.lane.b32.xlu0 %v873, 111
      %v989 = vpop.permute.xlu0 %988
      %990 = vrot.lane.b32.xlu0 %v874, 111
      %v991 = vpop.permute.xlu0 %990
      %992 = vrot.lane.b32.xlu0 %v875, 111
      %v993 = vpop.permute.xlu0 %992
      %vm994 = vcmask 908288
      %v995 = vsel %vm994, %v987, %v989
      %v996 = vsel %vm994, %v989, %v991
      %v997 = vsel %vm994, %v991, %v993
      %v999 = vsel %vm334, %v985, 0
      %v1002 = vsel %vm338, %v995, 0
      %v1005 = vsel %vm338, %v996, 0
      %v1008 = vsel %vm338, %v997, 0
      %1010 = vmatprep.subr.bf16.mxu0 %v1005
      %1011 = vmatpush1.bf16.msra.mxu0 %v1002
      %1012 = vmatprep.subr.bf16.mxu0 0
      %1013 = vmatpush1.bf16.msra.mxu0 0
      %1014 = vmatprep.subr.bf16.mxu0 0
      %1015 = vmatpush1.bf16.msra.mxu0 0
      %1016 = vmatprep.subr.bf16.mxu0 0
      %1017 = vmatpush1.bf16.msra.mxu0 0
      %1018 = vmatprep.subr.bf16.mxu0 0
      %1019 = vmatpush1.bf16.msra.mxu0 0
      %1020 = vmatprep.subr.bf16.mxu0 0
      %1021 = vmatpush1.bf16.msra.mxu0 0
      %1022 = vmatprep.subr.bf16.mxu0 0
      %1023 = vmatpush1.bf16.msra.mxu0 0
      %1024 = vmatprep.subr.bf16.mxu0 0
      %1025 = vmatpush1.bf16.msra.mxu0 0
      %1026 = vmatprep.subr.bf16.mxu0 0
      %1027 = vmatpush1.bf16.msra.mxu0 0
      %1028 = vmatprep.subr.bf16.mxu0 0
      %1029 = vmatpush1.bf16.msra.mxu0 0
      %1030 = vmatprep.subr.bf16.mxu0 0
      %1031 = vmatpush1.bf16.msra.mxu0 0
      %1032 = vmatprep.subr.bf16.mxu0 0
      %1033 = vmatpush1.bf16.msra.mxu0 0
      %1034 = vmatprep.subr.bf16.mxu0 0
      %1035 = vmatpush1.bf16.msra.mxu0 0
      %1036 = vmatprep.subr.bf16.mxu0 0
      %1037 = vmatpush1.bf16.msra.mxu0 0
      %1038 = vmatprep.subr.bf16.mxu0 0
      %1039 = vmatpush1.bf16.msra.mxu0 0
      %1040 = vmatprep.subr.bf16.mxu0 0
      %1041 = vmatpush1.bf16.msra.mxu0 0
      %1042 = vmatprep.mubr.bf16.mxu0 0
      %1043 = vmatmul.mubr.bf16.gmra.mrb[0].mxu0 %v999
      %v1044 = vpop.f32.mrb[0].mxu0
      %v1045 = vadd.f32 0.0, %v1044
      %v1046 = vpop.f32.mrb[0].mxu0
      %v1047 = vadd.f32 0.0, %v1046
      %v1048 = vpop.f32.mrb[0].mxu0
      %v1049 = vpop.f32.mrb[0].mxu0
      %1050 = vdwg.mxu0
      %1051 = vmatprep.subr.bf16.mxu0 0
      %1052 = vmatpush1.bf16.msra.mxu0 %v1008
      %1053 = vmatprep.subr.bf16.mxu0 0
      %1054 = vmatpush1.bf16.msra.mxu0 0
      %1055 = vmatprep.subr.bf16.mxu0 0
      %1056 = vmatpush1.bf16.msra.mxu0 0
      %1057 = vmatprep.subr.bf16.mxu0 0
      %1058 = vmatpush1.bf16.msra.mxu0 0
      %1059 = vmatprep.subr.bf16.mxu0 0
      %1060 = vmatpush1.bf16.msra.mxu0 0
      %1061 = vmatprep.subr.bf16.mxu0 0
      %1062 = vmatpush1.bf16.msra.mxu0 0
      %1063 = vmatprep.subr.bf16.mxu0 0
      %1064 = vmatpush1.bf16.msra.mxu0 0
      %1065 = vmatprep.subr.bf16.mxu0 0
      %1066 = vmatpush1.bf16.msra.mxu0 0
      %1067 = vmatprep.subr.bf16.mxu0 0
      %1068 = vmatpush1.bf16.msra.mxu0 0
      %1069 = vmatprep.subr.bf16.mxu0 0
      %1070 = vmatpush1.bf16.msra.mxu0 0
      %1071 = vmatprep.subr.bf16.mxu0 0
      %1072 = vmatpush1.bf16.msra.mxu0 0
      %1073 = vmatprep.subr.bf16.mxu0 0
      %1074 = vmatpush1.bf16.msra.mxu0 0
      %1075 = vmatprep.subr.bf16.mxu0 0
      %1076 = vmatpush1.bf16.msra.mxu0 0
      %1077 = vmatprep.subr.bf16.mxu0 0
      %1078 = vmatpush1.bf16.msra.mxu0 0
      %1079 = vmatprep.subr.bf16.mxu0 0
      %1080 = vmatpush1.bf16.msra.mxu0 0
      %1081 = vmatprep.subr.bf16.mxu0 0
      %1082 = vmatpush1.bf16.msra.mxu0 0
      %1083 = vmatprep.mubr.bf16.mxu0 0
      %1084 = vmatmul.mubr.bf16.gmra.mrb[0].mxu0 %v999
      %v1085 = vpop.f32.mrb[0].mxu0
      %v1086 = vadd.f32 0.0, %v1085
      %v1087 = vpop.f32.mrb[0].mxu0
      %v1088 = vpop.f32.mrb[0].mxu0
      %v1089 = vpop.f32.mrb[0].mxu0
      %1090 = vdwg.mxu0
      %v1091 = vadd.f32 %v981, %v1045
      %v1092 = vadd.f32 %v982, %v1047
      %v1093 = vadd.f32 %v983, %v1086
      %s1094 = scalar_lea.vmem %s2, 14
      %v1095 = vld [vmem:[%s1094] sm:$0x3]
      %1096 = vrot.lane.b32.xlu0 %v872, 110
      %v1097 = vpop.permute.xlu0 %1096
      %1098 = vrot.lane.b32.xlu0 %v873, 110
      %v1099 = vpop.permute.xlu0 %1098
      %1100 = vrot.lane.b32.xlu0 %v874, 110
      %v1101 = vpop.permute.xlu0 %1100
      %1102 = vrot.lane.b32.xlu0 %v875, 110
      %v1103 = vpop.permute.xlu0 %1102
      %vm1104 = vcmask 900096
      %v1105 = vsel %vm1104, %v1097, %v1099
      %v1106 = vsel %vm1104, %v1099, %v1101
      %v1107 = vsel %vm1104, %v1101, %v1103
      %v1109 = vsel %vm334, %v1095, 0
      %v1112 = vsel %vm338, %v1105, 0
      %v1115 = vsel %vm338, %v1106, 0
      %v1118 = vsel %vm338, %v1107, 0
      %1120 = vmatprep.subr.bf16.mxu0 %v1115
      %1121 = vmatpush1.bf16.msra.mxu0 %v1112
      %1122 = vmatprep.subr.bf16.mxu0 0
      %1123 = vmatpush1.bf16.msra.mxu0 0
      %1124 = vmatprep.subr.bf16.mxu0 0
      %1125 = vmatpush1.bf16.msra.mxu0 0
      %1126 = vmatprep.subr.bf16.mxu0 0
      %1127 = vmatpush1.bf16.msra.mxu0 0
      %1128 = vmatprep.subr.bf16.mxu0 0
      %1129 = vmatpush1.bf16.msra.mxu0 0
      %1130 = vmatprep.subr.bf16.mxu0 0
      %1131 = vmatpush1.bf16.msra.mxu0 0
      %1132 = vmatprep.subr.bf16.mxu0 0
      %1133 = vmatpush1.bf16.msra.mxu0 0
      %1134 = vmatprep.subr.bf16.mxu0 0
      %1135 = vmatpush1.bf16.msra.mxu0 0
      %1136 = vmatprep.subr.bf16.mxu0 0
      %1137 = vmatpush1.bf16.msra.mxu0 0
      %1138 = vmatprep.subr.bf16.mxu0 0
      %1139 = vmatpush1.bf16.msra.mxu0 0
      %1140 = vmatprep.subr.bf16.mxu0 0
      %1141 = vmatpush1.bf16.msra.mxu0 0
      %1142 = vmatprep.subr.bf16.mxu0 0
      %1143 = vmatpush1.bf16.msra.mxu0 0
      %1144 = vmatprep.subr.bf16.mxu0 0
      %1145 = vmatpush1.bf16.msra.mxu0 0
      %1146 = vmatprep.subr.bf16.mxu0 0
      %1147 = vmatpush1.bf16.msra.mxu0 0
      %1148 = vmatprep.subr.bf16.mxu0 0
      %1149 = vmatpush1.bf16.msra.mxu0 0
      %1150 = vmatprep.subr.bf16.mxu0 0
      %1151 = vmatpush1.bf16.msra.mxu0 0
      %1152 = vmatprep.mubr.bf16.mxu0 0
      %1153 = vmatmul.mubr.bf16.gmra.mrb[0].mxu0 %v1109
      %v1154 = vpop.f32.mrb[0].mxu0
      %v1155 = vadd.f32 0.0, %v1154
      %v1156 = vpop.f32.mrb[0].mxu0
      %v1157 = vadd.f32 0.0, %v1156
      %v1158 = vpop.f32.mrb[0].mxu0
      %v1159 = vpop.f32.mrb[0].mxu0
      %1160 = vdwg.mxu0
      %1161 = vmatprep.subr.bf16.mxu0 0
      %1162 = vmatpush1.bf16.msra.mxu0 %v1118
      %1163 = vmatprep.subr.bf16.mxu0 0
      %1164 = vmatpush1.bf16.msra.mxu0 0
      %1165 = vmatprep.subr.bf16.mxu0 0
      %1166 = vmatpush1.bf16.msra.mxu0 0
      %1167 = vmatprep.subr.bf16.mxu0 0
      %1168 = vmatpush1.bf16.msra.mxu0 0
      %1169 = vmatprep.subr.bf16.mxu0 0
      %1170 = vmatpush1.bf16.msra.mxu0 0
      %1171 = vmatprep.subr.bf16.mxu0 0
      %1172 = vmatpush1.bf16.msra.mxu0 0
      %1173 = vmatprep.subr.bf16.mxu0 0
      %1174 = vmatpush1.bf16.msra.mxu0 0
      %1175 = vmatprep.subr.bf16.mxu0 0
      %1176 = vmatpush1.bf16.msra.mxu0 0
      %1177 = vmatprep.subr.bf16.mxu0 0
      %1178 = vmatpush1.bf16.msra.mxu0 0
      %1179 = vmatprep.subr.bf16.mxu0 0
      %1180 = vmatpush1.bf16.msra.mxu0 0
      %1181 = vmatprep.subr.bf16.mxu0 0
      %1182 = vmatpush1.bf16.msra.mxu0 0
      %1183 = vmatprep.subr.bf16.mxu0 0
      %1184 = vmatpush1.bf16.msra.mxu0 0
      %1185 = vmatprep.subr.bf16.mxu0 0
      %1186 = vmatpush1.bf16.msra.mxu0 0
      %1187 = vmatprep.subr.bf16.mxu0 0
      %1188 = vmatpush1.bf16.msra.mxu0 0
      %1189 = vmatprep.subr.bf16.mxu0 0
      %1190 = vmatpush1.bf16.msra.mxu0 0
      %1191 = vmatprep.subr.bf16.mxu0 0
      %1192 = vmatpush1.bf16.msra.mxu0 0
      %1193 = vmatprep.mubr.bf16.mxu0 0
      %1194 = vmatmul.mubr.bf16.gmra.mrb[0].mxu0 %v1109
      %v1195 = vpop.f32.mrb[0].mxu0
      %v1196 = vadd.f32 0.0, %v1195
      %v1197 = vpop.f32.mrb[0].mxu0
      %v1198 = vpop.f32.mrb[0].mxu0
      %v1199 = vpop.f32.mrb[0].mxu0
      %1200 = vdwg.mxu0
      %v1201 = vadd.f32 %v1091, %v1155
      %v1202 = vadd.f32 %v1092, %v1157
      %v1203 = vadd.f32 %v1093, %v1196
      %s1204 = scalar_lea.vmem %s2, 16
      %v1205 = vld [vmem:[%s1204] sm:$0x3]
      %1206 = vrot.lane.b32.xlu0 %v872, 109
      %v1207 = vpop.permute.xlu0 %1206
      %1208 = vrot.lane.b32.xlu0 %v873, 109
      %v1209 = vpop.permute.xlu0 %1208
      %1210 = vrot.lane.b32.xlu0 %v874, 109
      %v1211 = vpop.permute.xlu0 %1210
      %1212 = vrot.lane.b32.xlu0 %v875, 109
      %v1213 = vpop.permute.xlu0 %1212
      %vm1214 = vcmask 891904
      %v1215 = vsel %vm1214, %v1207, %v1209
      %v1216 = vsel %vm1214, %v1209, %v1211
      %v1217 = vsel %vm1214, %v1211, %v1213
      %v1219 = vsel %vm334, %v1205, 0
      %v1222 = vsel %vm338, %v1215, 0
      %v1225 = vsel %vm338, %v1216, 0
      %v1228 = vsel %vm338, %v1217, 0
      %1230 = vmatprep.subr.bf16.mxu0 %v1225
      %1231 = vmatpush1.bf16.msra.mxu0 %v1222
      %1232 = vmatprep.subr.bf16.mxu0 0
      %1233 = vmatpush1.bf16.msra.mxu0 0
      %1234 = vmatprep.subr.bf16.mxu0 0
      %1235 = vmatpush1.bf16.msra.mxu0 0
      %1236 = vmatprep.subr.bf16.mxu0 0
      %1237 = vmatpush1.bf16.msra.mxu0 0
      %1238 = vmatprep.subr.bf16.mxu0 0
      %1239 = vmatpush1.bf16.msra.mxu0 0
      %1240 = vmatprep.subr.bf16.mxu0 0
      %1241 = vmatpush1.bf16.msra.mxu0 0
      %1242 = vmatprep.subr.bf16.mxu0 0
      %1243 = vmatpush1.bf16.msra.mxu0 0
      %1244 = vmatprep.subr.bf16.mxu0 0
      %1245 = vmatpush1.bf16.msra.mxu0 0
      %1246 = vmatprep.subr.bf16.mxu0 0
      %1247 = vmatpush1.bf16.msra.mxu0 0
      %1248 = vmatprep.subr.bf16.mxu0 0
      %1249 = vmatpush1.bf16.msra.mxu0 0
      %1250 = vmatprep.subr.bf16.mxu0 0
      %1251 = vmatpush1.bf16.msra.mxu0 0
      %1252 = vmatprep.subr.bf16.mxu0 0
      %1253 = vmatpush1.bf16.msra.mxu0 0
      %1254 = vmatprep.subr.bf16.mxu0 0
      %1255 = vmatpush1.bf16.msra.mxu0 0
      %1256 = vmatprep.subr.bf16.mxu0 0
      %1257 = vmatpush1.bf16.msra.mxu0 0
      %1258 = vmatprep.subr.bf16.mxu0 0
      %1259 = vmatpush1.bf16.msra.mxu0 0
      %1260 = vmatprep.subr.bf16.mxu0 0
      %1261 = vmatpush1.bf16.msra.mxu0 0
      %1262 = vmatprep.mubr.bf16.mxu0 0
      %1263 = vmatmul.mubr.bf16.gmra.mrb[0].mxu0 %v1219
      %v1264 = vpop.f32.mrb[0].mxu0
      %v1265 = vadd.f32 0.0, %v1264
      %v1266 = vpop.f32.mrb[0].mxu0
      %v1267 = vadd.f32 0.0, %v1266
      %v1268 = vpop.f32.mrb[0].mxu0
      %v1269 = vpop.f32.mrb[0].mxu0
      %1270 = vdwg.mxu0
      %1271 = vmatprep.subr.bf16.mxu0 0
      %1272 = vmatpush1.bf16.msra.mxu0 %v1228
      %1273 = vmatprep.subr.bf16.mxu0 0
      %1274 = vmatpush1.bf16.msra.mxu0 0
      %1275 = vmatprep.subr.bf16.mxu0 0
      %1276 = vmatpush1.bf16.msra.mxu0 0
      %1277 = vmatprep.subr.bf16.mxu0 0
      %1278 = vmatpush1.bf16.msra.mxu0 0
      %1279 = vmatprep.subr.bf16.mxu0 0
      %1280 = vmatpush1.bf16.msra.mxu0 0
      %1281 = vmatprep.subr.bf16.mxu0 0
      %1282 = vmatpush1.bf16.msra.mxu0 0
      %1283 = vmatprep.subr.bf16.mxu0 0
      %1284 = vmatpush1.bf16.msra.mxu0 0
      %1285 = vmatprep.subr.bf16.mxu0 0
      %1286 = vmatpush1.bf16.msra.mxu0 0
      %1287 = vmatprep.subr.bf16.mxu0 0
      %1288 = vmatpush1.bf16.msra.mxu0 0
      %1289 = vmatprep.subr.bf16.mxu0 0
      %1290 = vmatpush1.bf16.msra.mxu0 0
      %1291 = vmatprep.subr.bf16.mxu0 0
      %1292 = vmatpush1.bf16.msra.mxu0 0
      %1293 = vmatprep.subr.bf16.mxu0 0
      %1294 = vmatpush1.bf16.msra.mxu0 0
      %1295 = vmatprep.subr.bf16.mxu0 0
      %1296 = vmatpush1.bf16.msra.mxu0 0
      %1297 = vmatprep.subr.bf16.mxu0 0
      %1298 = vmatpush1.bf16.msra.mxu0 0
      %1299 = vmatprep.subr.bf16.mxu0 0
      %1300 = vmatpush1.bf16.msra.mxu0 0
      %1301 = vmatprep.subr.bf16.mxu0 0
      %1302 = vmatpush1.bf16.msra.mxu0 0
      %1303 = vmatprep.mubr.bf16.mxu0 0
      %1304 = vmatmul.mubr.bf16.gmra.mrb[0].mxu0 %v1219
      %v1305 = vpop.f32.mrb[0].mxu0
      %v1306 = vadd.f32 0.0, %v1305
      %v1307 = vpop.f32.mrb[0].mxu0
      %v1308 = vpop.f32.mrb[0].mxu0
      %v1309 = vpop.f32.mrb[0].mxu0
      %1310 = vdwg.mxu0
      %v1311 = vadd.f32 %v1201, %v1265
      %v1312 = vadd.f32 %v1202, %v1267
      %v1313 = vadd.f32 %v1203, %v1306
      %v1314 = vld [vmem:[%s3] sm:$0xf]
      %1316 = vset.pattern.permute.xlu0 0
      %1317 = vperm.xlu0 %1316, %v1314
      %v1318 = vpop.permute.xlu0 %1317
      %v1320 = vmul.f32 %v1311, %v1318
      %v1321 = vmul.f32 %v1312, %v1318
      %v1322 = vmul.f32 %v1313, %v1318
      %v1323 = vld [vmem:[%s4] sm:$0xf]
      %1325 = vset.pattern.permute.xlu0 0
      %1326 = vperm.xlu0 %1325, %v1323
      %v1327 = vpop.permute.xlu0 %1326
      %v1329 = vadd.f32 %v1320, %v1327
      %v1330 = vadd.f32 %v1321, %v1327
      %v1331 = vadd.f32 %v1322, %v1327
      %v1332 = vmax.f32 %v1329, 0.0
      %v1333 = vmax.f32 %v1330, 0.0
      %v1334 = vmax.f32 %v1331, 0.0
      %v1335 = vld [vmem:[%s1] sm:$0x7]
      %v1337 = vlaneseq
      %v1338 = vshrl.u32 %v1337, 7
      %v1339 = vsub.s32 0, %v1338
      %v1340 = vrot.slane %v1335, %v1339
      %v1341 = vlaneseq
      %v1342 = vshrl.u32 %v1341, 7
      %v1343 = vsub.s32 1, %v1342
      %v1344 = vrot.slane %v1335, %v1343
      %v1345 = vlaneseq
      %v1346 = vshrl.u32 %v1345, 7
      %v1347 = vsub.s32 2, %v1346
      %v1348 = vrot.slane %v1335, %v1347
      %v1352 = vmul.f32 %v1332, %v1340
      %v1353 = vmul.f32 %v1333, %v1344
      %v1354 = vmul.f32 %v1334, %v1348
      %1355 = vst [vmem:[#allocation2] sm:$0x3] 0
      %1356 = vst [vmem:[#allocation2 + $0x8] sm:$0x3] 0
      %v1357 = vpack.c.bf16 %v1352, %v1352
      %v1358 = vpack.c.bf16 %v1353, %v1353
      %v1359 = vpack.c.bf16 %v1354, %v1354
      %v1363 = vcombine.low %v1357, %v1358
      %v1365 = vunpack.c.l.s4 1983009808
      %v1366 = vunpack.c.0.s8 %v1365
      %v1367 = vlaneseq
      %v1368 = vshrl.u32 %v1367, 7
      %v1369 = vsub.s32 %v1366, %v1368
      %v1370 = vrot.slane %v1363, %v1369
      %v1372 = vunpack.c.l.s4 1983009808
      %v1373 = vunpack.c.0.s8 %v1372
      %v1374 = vlaneseq
      %v1375 = vshrl.u32 %v1374, 7
      %v1376 = vsub.s32 %v1373, %v1375
      %v1377 = vrot.slane %v1359, %v1376
      %v1378 = vcombine.low %v1370, %v1377
      %1380 = vst [vmem:[#allocation2 + $0x2] sm:$0x3f] %v1378
      %v1381 = vld [vmem:[%s5] sm:$0x3]
      %v1382 = vld [vmem:[#allocation2] sm:$0xff]
      %s1383 = scalar_lea.vmem %s5, 2
      %v1384 = vld [vmem:[%s1383] sm:$0x3]
      %v1386 = vcombine.high %v1382, %v1382
      %v1388 = vunpack.c.l.s4 1983009808
      %v1389 = vunpack.c.0.s8 %v1388
      %v1390 = vlaneseq
      %v1391 = vshrl.u32 %v1390, 7
      %v1392 = vsub.s32 %v1389, %v1391
      %v1393 = vrot.slane %v1382, %v1392
      %v1395 = vunpack.c.l.s4 1983009808
      %v1396 = vunpack.c.0.s8 %v1395
      %v1397 = vlaneseq
      %v1398 = vshrl.u32 %v1397, 7
      %v1399 = vsub.s32 %v1396, %v1398
      %v1400 = vrot.slane %v1386, %v1399
      %v1401 = vcombine.high %v1393, %v1393
      %v1402 = vcombine.high %v1400, %v1400
      %1403 = vrot.lane.b32.xlu0 %v1393, 18
      %v1404 = vpop.permute.xlu0 %1403
      %1405 = vrot.lane.b32.xlu0 %v1401, 18
      %v1406 = vpop.permute.xlu0 %1405
      %1407 = vrot.lane.b32.xlu0 %v1400, 18
      %v1408 = vpop.permute.xlu0 %1407
      %1409 = vrot.lane.b32.xlu0 %v1402, 18
      %v1410 = vpop.permute.xlu0 %1409
      %v1411 = vsel %vm330, %v1404, %v1406
      %v1412 = vsel %vm330, %v1406, %v1408
      %v1413 = vsel %vm330, %v1408, %v1410
      %vm1414 = vcmask 31744
      %v1416 = vsel %vm1414, %v1384, 0
      %vm1418 = vcmask 1041408
      %v1420 = vsel %vm1418, %v1411, 0
      %v1423 = vsel %vm1418, %v1412, 0
      %v1426 = vsel %vm1418, %v1413, 0
      %1428 = vmatprep.subr.bf16.mxu0 %v1423
      %1429 = vmatpush1.bf16.msra.mxu0 %v1420
      %1430 = vmatprep.subr.bf16.mxu0 0
      %1431 = vmatpush1.bf16.msra.mxu0 0
      %1432 = vmatprep.subr.bf16.mxu0 0
      %1433 = vmatpush1.bf16.msra.mxu0 0
      %1434 = vmatprep.subr.bf16.mxu0 0
      %1435 = vmatpush1.bf16.msra.mxu0 0
      %1436 = vmatprep.subr.bf16.mxu0 0
      %1437 = vmatpush1.bf16.msra.mxu0 0
      %1438 = vmatprep.subr.bf16.mxu0 0
      %1439 = vmatpush1.bf16.msra.mxu0 0
      %1440 = vmatprep.subr.bf16.mxu0 0
      %1441 = vmatpush1.bf16.msra.mxu0 0
      %1442 = vmatprep.subr.bf16.mxu0 0
      %1443 = vmatpush1.bf16.msra.mxu0 0
      %1444 = vmatprep.subr.bf16.mxu0 0
      %1445 = vmatpush1.bf16.msra.mxu0 0
      %1446 = vmatprep.subr.bf16.mxu0 0
      %1447 = vmatpush1.bf16.msra.mxu0 0
      %1448 = vmatprep.subr.bf16.mxu0 0
      %1449 = vmatpush1.bf16.msra.mxu0 0
      %1450 = vmatprep.subr.bf16.mxu0 0
      %1451 = vmatpush1.bf16.msra.mxu0 0
      %1452 = vmatprep.subr.bf16.mxu0 0
      %1453 = vmatpush1.bf16.msra.mxu0 0
      %1454 = vmatprep.subr.bf16.mxu0 0
      %1455 = vmatpush1.bf16.msra.mxu0 0
      %1456 = vmatprep.subr.bf16.mxu0 0
      %1457 = vmatpush1.bf16.msra.mxu0 0
      %1458 = vmatprep.subr.bf16.mxu0 0
      %1459 = vmatpush1.bf16.msra.mxu0 0
      %1460 = vmatprep.mubr.bf16.mxu0 0
      %1461 = vmatmul.mubr.bf16.gmra.mrb[0].mxu0 %v1416
      %v1462 = vpop.f32.mrb[0].mxu0
      %v1463 = vadd.f32 0.0, %v1462
      %v1464 = vpop.f32.mrb[0].mxu0
      %v1465 = vadd.f32 0.0, %v1464
      %v1466 = vpop.f32.mrb[0].mxu0
      %v1467 = vpop.f32.mrb[0].mxu0
      %1468 = vdwg.mxu0
      %1469 = vmatprep.subr.bf16.mxu0 0
      %1470 = vmatpush1.bf16.msra.mxu0 %v1426
      %1471 = vmatprep.subr.bf16.mxu0 0
      %1472 = vmatpush1.bf16.msra.mxu0 0
      %1473 = vmatprep.subr.bf16.mxu0 0
      %1474 = vmatpush1.bf16.msra.mxu0 0
      %1475 = vmatprep.subr.bf16.mxu0 0
      %1476 = vmatpush1.bf16.msra.mxu0 0
      %1477 = vmatprep.subr.bf16.mxu0 0
      %1478 = vmatpush1.bf16.msra.mxu0 0
      %1479 = vmatprep.subr.bf16.mxu0 0
      %1480 = vmatpush1.bf16.msra.mxu0 0
      %1481 = vmatprep.subr.bf16.mxu0 0
      %1482 = vmatpush1.bf16.msra.mxu0 0
      %1483 = vmatprep.subr.bf16.mxu0 0
      %1484 = vmatpush1.bf16.msra.mxu0 0
      %1485 = vmatprep.subr.bf16.mxu0 0
      %1486 = vmatpush1.bf16.msra.mxu0 0
      %1487 = vmatprep.subr.bf16.mxu0 0
      %1488 = vmatpush1.bf16.msra.mxu0 0
      %1489 = vmatprep.subr.bf16.mxu0 0
      %1490 = vmatpush1.bf16.msra.mxu0 0
      %1491 = vmatprep.subr.bf16.mxu0 0
      %1492 = vmatpush1.bf16.msra.mxu0 0
      %1493 = vmatprep.subr.bf16.mxu0 0
      %1494 = vmatpush1.bf16.msra.mxu0 0
      %1495 = vmatprep.subr.bf16.mxu0 0
      %1496 = vmatpush1.bf16.msra.mxu0 0
      %1497 = vmatprep.subr.bf16.mxu0 0
      %1498 = vmatpush1.bf16.msra.mxu0 0
      %1499 = vmatprep.subr.bf16.mxu0 0
      %1500 = vmatpush1.bf16.msra.mxu0 0
      %1501 = vmatprep.mubr.bf16.mxu0 0
      %1502 = vmatmul.mubr.bf16.gmra.mrb[0].mxu0 %v1416
      %v1503 = vpop.f32.mrb[0].mxu0
      %v1504 = vadd.f32 0.0, %v1503
      %v1505 = vpop.f32.mrb[0].mxu0
      %v1506 = vpop.f32.mrb[0].mxu0
      %v1507 = vpop.f32.mrb[0].mxu0
      %1508 = vdwg.mxu0
      %1509 = vrot.lane.b32.xlu0 %v1393, 19
      %v1510 = vpop.permute.xlu0 %1509
      %1511 = vrot.lane.b32.xlu0 %v1401, 19
      %v1512 = vpop.permute.xlu0 %1511
      %1513 = vrot.lane.b32.xlu0 %v1400, 19
      %v1514 = vpop.permute.xlu0 %1513
      %1515 = vrot.lane.b32.xlu0 %v1402, 19
      %v1516 = vpop.permute.xlu0 %1515
      %v1517 = vsel %vm437, %v1510, %v1512
      %v1518 = vsel %vm437, %v1512, %v1514
      %v1519 = vsel %vm437, %v1514, %v1516
      %v1521 = vsel %vm1414, %v1381, 0
      %v1524 = vsel %vm1418, %v1517, 0
      %v1527 = vsel %vm1418, %v1518, 0
      %v1530 = vsel %vm1418, %v1519, 0
      %1532 = vmatprep.subr.bf16.mxu0 %v1527
      %1533 = vmatpush1.bf16.msra.mxu0 %v1524
      %1534 = vmatprep.subr.bf16.mxu0 0
      %1535 = vmatpush1.bf16.msra.mxu0 0
      %1536 = vmatprep.subr.bf16.mxu0 0
      %1537 = vmatpush1.bf16.msra.mxu0 0
      %1538 = vmatprep.subr.bf16.mxu0 0
      %1539 = vmatpush1.bf16.msra.mxu0 0
      %1540 = vmatprep.subr.bf16.mxu0 0
      %1541 = vmatpush1.bf16.msra.mxu0 0
      %1542 = vmatprep.subr.bf16.mxu0 0
      %1543 = vmatpush1.bf16.msra.mxu0 0
      %1544 = vmatprep.subr.bf16.mxu0 0
      %1545 = vmatpush1.bf16.msra.mxu0 0
      %1546 = vmatprep.subr.bf16.mxu0 0
      %1547 = vmatpush1.bf16.msra.mxu0 0
      %1548 = vmatprep.subr.bf16.mxu0 0
      %1549 = vmatpush1.bf16.msra.mxu0 0
      %1550 = vmatprep.subr.bf16.mxu0 0
      %1551 = vmatpush1.bf16.msra.mxu0 0
      %1552 = vmatprep.subr.bf16.mxu0 0
      %1553 = vmatpush1.bf16.msra.mxu0 0
      %1554 = vmatprep.subr.bf16.mxu0 0
      %1555 = vmatpush1.bf16.msra.mxu0 0
      %1556 = vmatprep.subr.bf16.mxu0 0
      %1557 = vmatpush1.bf16.msra.mxu0 0
      %1558 = vmatprep.subr.bf16.mxu0 0
      %1559 = vmatpush1.bf16.msra.mxu0 0
      %1560 = vmatprep.subr.bf16.mxu0 0
      %1561 = vmatpush1.bf16.msra.mxu0 0
      %1562 = vmatprep.subr.bf16.mxu0 0
      %1563 = vmatpush1.bf16.msra.mxu0 0
      %1564 = vmatprep.mubr.bf16.mxu0 0
      %1565 = vmatmul.mubr.bf16.gmra.mrb[0].mxu0 %v1521
      %v1566 = vpop.f32.mrb[0].mxu0
      %v1567 = vadd.f32 %v1463, %v1566
      %v1568 = vpop.f32.mrb[0].mxu0
      %v1569 = vadd.f32 %v1465, %v1568
      %v1570 = vpop.f32.mrb[0].mxu0
      %v1571 = vpop.f32.mrb[0].mxu0
      %1572 = vdwg.mxu0
      %1573 = vmatprep.subr.bf16.mxu0 0
      %1574 = vmatpush1.bf16.msra.mxu0 %v1530
      %1575 = vmatprep.subr.bf16.mxu0 0
      %1576 = vmatpush1.bf16.msra.mxu0 0
      %1577 = vmatprep.subr.bf16.mxu0 0
      %1578 = vmatpush1.bf16.msra.mxu0 0
      %1579 = vmatprep.subr.bf16.mxu0 0
      %1580 = vmatpush1.bf16.msra.mxu0 0
      %1581 = vmatprep.subr.bf16.mxu0 0
      %1582 = vmatpush1.bf16.msra.mxu0 0
      %1583 = vmatprep.subr.bf16.mxu0 0
      %1584 = vmatpush1.bf16.msra.mxu0 0
      %1585 = vmatprep.subr.bf16.mxu0 0
      %1586 = vmatpush1.bf16.msra.mxu0 0
      %1587 = vmatprep.subr.bf16.mxu0 0
      %1588 = vmatpush1.bf16.msra.mxu0 0
      %1589 = vmatprep.subr.bf16.mxu0 0
      %1590 = vmatpush1.bf16.msra.mxu0 0
      %1591 = vmatprep.subr.bf16.mxu0 0
      %1592 = vmatpush1.bf16.msra.mxu0 0
      %1593 = vmatprep.subr.bf16.mxu0 0
      %1594 = vmatpush1.bf16.msra.mxu0 0
      %1595 = vmatprep.subr.bf16.mxu0 0
      %1596 = vmatpush1.bf16.msra.mxu0 0
      %1597 = vmatprep.subr.bf16.mxu0 0
      %1598 = vmatpush1.bf16.msra.mxu0 0
      %1599 = vmatprep.subr.bf16.mxu0 0
      %1600 = vmatpush1.bf16.msra.mxu0 0
      %1601 = vmatprep.subr.bf16.mxu0 0
      %1602 = vmatpush1.bf16.msra.mxu0 0
      %1603 = vmatprep.subr.bf16.mxu0 0
      %1604 = vmatpush1.bf16.msra.mxu0 0
      %1605 = vmatprep.mubr.bf16.mxu0 0
      %1606 = vmatmul.mubr.bf16.gmra.mrb[0].mxu0 %v1521
      %v1607 = vpop.f32.mrb[0].mxu0
      %v1608 = vadd.f32 %v1504, %v1607
      %v1609 = vpop.f32.mrb[0].mxu0
      %v1610 = vpop.f32.mrb[0].mxu0
      %v1611 = vpop.f32.mrb[0].mxu0
      %1612 = vdwg.mxu0
      %s1613 = scalar_lea.vmem %s5, 4
      %v1614 = vld [vmem:[%s1613] sm:$0x3]
      %v1615 = vld [vmem:[#allocation2] sm:$0xff]
      %v1617 = vcombine.high %v1615, %v1615
      %v1619 = vunpack.c.l.s4 1983009808
      %v1620 = vunpack.c.0.s8 %v1619
      %v1621 = vlaneseq
      %v1622 = vshrl.u32 %v1621, 7
      %v1623 = vsub.s32 %v1620, %v1622
      %v1624 = vrot.slane %v1615, %v1623
      %v1626 = vunpack.c.l.s4 1983009808
      %v1627 = vunpack.c.0.s8 %v1626
      %v1628 = vlaneseq
      %v1629 = vshrl.u32 %v1628, 7
      %v1630 = vsub.s32 %v1627, %v1629
      %v1631 = vrot.slane %v1617, %v1630
      %v1632 = vcombine.high %v1624, %v1624
      %v1633 = vcombine.high %v1631, %v1631
      %1634 = vrot.lane.b32.xlu0 %v1624, 17
      %v1635 = vpop.permute.xlu0 %1634
      %1636 = vrot.lane.b32.xlu0 %v1632, 17
      %v1637 = vpop.permute.xlu0 %1636
      %1638 = vrot.lane.b32.xlu0 %v1631, 17
      %v1639 = vpop.permute.xlu0 %1638
      %1640 = vrot.lane.b32.xlu0 %v1633, 17
      %v1641 = vpop.permute.xlu0 %1640
      %v1642 = vsel %vm544, %v1635, %v1637
      %v1643 = vsel %vm544, %v1637, %v1639
      %v1644 = vsel %vm544, %v1639, %v1641
      %v1646 = vsel %vm1414, %v1614, 0
      %v1649 = vsel %vm1418, %v1642, 0
      %v1652 = vsel %vm1418, %v1643, 0
      %v1655 = vsel %vm1418, %v1644, 0
      %1657 = vmatprep.subr.bf16.mxu0 %v1652
      %1658 = vmatpush1.bf16.msra.mxu0 %v1649
      %1659 = vmatprep.subr.bf16.mxu0 0
      %1660 = vmatpush1.bf16.msra.mxu0 0
      %1661 = vmatprep.subr.bf16.mxu0 0
      %1662 = vmatpush1.bf16.msra.mxu0 0
      %1663 = vmatprep.subr.bf16.mxu0 0
      %1664 = vmatpush1.bf16.msra.mxu0 0
      %1665 = vmatprep.subr.bf16.mxu0 0
      %1666 = vmatpush1.bf16.msra.mxu0 0
      %1667 = vmatprep.subr.bf16.mxu0 0
      %1668 = vmatpush1.bf16.msra.mxu0 0
      %1669 = vmatprep.subr.bf16.mxu0 0
      %1670 = vmatpush1.bf16.msra.mxu0 0
      %1671 = vmatprep.subr.bf16.mxu0 0
      %1672 = vmatpush1.bf16.msra.mxu0 0
      %1673 = vmatprep.subr.bf16.mxu0 0
      %1674 = vmatpush1.bf16.msra.mxu0 0
      %1675 = vmatprep.subr.bf16.mxu0 0
      %1676 = vmatpush1.bf16.msra.mxu0 0
      %1677 = vmatprep.subr.bf16.mxu0 0
      %1678 = vmatpush1.bf16.msra.mxu0 0
      %1679 = vmatprep.subr.bf16.mxu0 0
      %1680 = vmatpush1.bf16.msra.mxu0 0
      %1681 = vmatprep.subr.bf16.mxu0 0
      %1682 = vmatpush1.bf16.msra.mxu0 0
      %1683 = vmatprep.subr.bf16.mxu0 0
      %1684 = vmatpush1.bf16.msra.mxu0 0
      %1685 = vmatprep.subr.bf16.mxu0 0
      %1686 = vmatpush1.bf16.msra.mxu0 0
      %1687 = vmatprep.subr.bf16.mxu0 0
      %1688 = vmatpush1.bf16.msra.mxu0 0
      %1689 = vmatprep.mubr.bf16.mxu0 0
      %1690 = vmatmul.mubr.bf16.gmra.mrb[0].mxu0 %v1646
      %v1691 = vpop.f32.mrb[0].mxu0
      %v1692 = vadd.f32 0.0, %v1691
      %v1693 = vpop.f32.mrb[0].mxu0
      %v1694 = vadd.f32 0.0, %v1693
      %v1695 = vpop.f32.mrb[0].mxu0
      %v1696 = vpop.f32.mrb[0].mxu0
      %1697 = vdwg.mxu0
      %1698 = vmatprep.subr.bf16.mxu0 0
      %1699 = vmatpush1.bf16.msra.mxu0 %v1655
      %1700 = vmatprep.subr.bf16.mxu0 0
      %1701 = vmatpush1.bf16.msra.mxu0 0
      %1702 = vmatprep.subr.bf16.mxu0 0
      %1703 = vmatpush1.bf16.msra.mxu0 0
      %1704 = vmatprep.subr.bf16.mxu0 0
      %1705 = vmatpush1.bf16.msra.mxu0 0
      %1706 = vmatprep.subr.bf16.mxu0 0
      %1707 = vmatpush1.bf16.msra.mxu0 0
      %1708 = vmatprep.subr.bf16.mxu0 0
      %1709 = vmatpush1.bf16.msra.mxu0 0
      %1710 = vmatprep.subr.bf16.mxu0 0
      %1711 = vmatpush1.bf16.msra.mxu0 0
      %1712 = vmatprep.subr.bf16.mxu0 0
      %1713 = vmatpush1.bf16.msra.mxu0 0
      %1714 = vmatprep.subr.bf16.mxu0 0
      %1715 = vmatpush1.bf16.msra.mxu0 0
      %1716 = vmatprep.subr.bf16.mxu0 0
      %1717 = vmatpush1.bf16.msra.mxu0 0
      %1718 = vmatprep.subr.bf16.mxu0 0
      %1719 = vmatpush1.bf16.msra.mxu0 0
      %1720 = vmatprep.subr.bf16.mxu0 0
      %1721 = vmatpush1.bf16.msra.mxu0 0
      %1722 = vmatprep.subr.bf16.mxu0 0
      %1723 = vmatpush1.bf16.msra.mxu0 0
      %1724 = vmatprep.subr.bf16.mxu0 0
      %1725 = vmatpush1.bf16.msra.mxu0 0
      %1726 = vmatprep.subr.bf16.mxu0 0
      %1727 = vmatpush1.bf16.msra.mxu0 0
      %1728 = vmatprep.subr.bf16.mxu0 0
      %1729 = vmatpush1.bf16.msra.mxu0 0
      %1730 = vmatprep.mubr.bf16.mxu0 0
      %1731 = vmatmul.mubr.bf16.gmra.mrb[0].mxu0 %v1646
      %v1732 = vpop.f32.mrb[0].mxu0
      %v1733 = vadd.f32 0.0, %v1732
      %v1734 = vpop.f32.mrb[0].mxu0
      %v1735 = vpop.f32.mrb[0].mxu0
      %v1736 = vpop.f32.mrb[0].mxu0
      %1737 = vdwg.mxu0
      %v1738 = vadd.f32 %v1567, %v1692
      %v1739 = vadd.f32 %v1569, %v1694
      %v1740 = vadd.f32 %v1608, %v1733
      %s1741 = scalar_lea.vmem %s5, 6
      %v1742 = vld [vmem:[%s1741] sm:$0x3]
      %v1743 = vld [vmem:[#allocation2] sm:$0xff]
      %v1745 = vcombine.high %v1743, %v1743
      %v1747 = vunpack.c.l.s4 1983009808
      %v1748 = vunpack.c.0.s8 %v1747
      %v1749 = vlaneseq
      %v1750 = vshrl.u32 %v1749, 7
      %v1751 = vsub.s32 %v1748, %v1750
      %v1752 = vrot.slane %v1743, %v1751
      %v1754 = vunpack.c.l.s4 1983009808
      %v1755 = vunpack.c.0.s8 %v1754
      %v1756 = vlaneseq
      %v1757 = vshrl.u32 %v1756, 7
      %v1758 = vsub.s32 %v1755, %v1757
      %v1759 = vrot.slane %v1745, %v1758
      %v1760 = vcombine.high %v1752, %v1752
      %v1761 = vcombine.high %v1759, %v1759
      %1762 = vrot.lane.b32.xlu0 %v1752, 1
      %v1763 = vpop.permute.xlu0 %1762
      %1764 = vrot.lane.b32.xlu0 %v1760, 1
      %v1765 = vpop.permute.xlu0 %1764
      %1766 = vrot.lane.b32.xlu0 %v1759, 1
      %v1767 = vpop.permute.xlu0 %1766
      %1768 = vrot.lane.b32.xlu0 %v1761, 1
      %v1769 = vpop.permute.xlu0 %1768
      %v1770 = vsel %vm654, %v1763, %v1765
      %v1771 = vsel %vm654, %v1765, %v1767
      %v1772 = vsel %vm654, %v1767, %v1769
      %v1774 = vsel %vm1414, %v1742, 0
      %v1777 = vsel %vm1418, %v1770, 0
      %v1780 = vsel %vm1418, %v1771, 0
      %v1783 = vsel %vm1418, %v1772, 0
      %1785 = vmatprep.subr.bf16.mxu0 %v1780
      %1786 = vmatpush1.bf16.msra.mxu0 %v1777
      %1787 = vmatprep.subr.bf16.mxu0 0
      %1788 = vmatpush1.bf16.msra.mxu0 0
      %1789 = vmatprep.subr.bf16.mxu0 0
      %1790 = vmatpush1.bf16.msra.mxu0 0
      %1791 = vmatprep.subr.bf16.mxu0 0
      %1792 = vmatpush1.bf16.msra.mxu0 0
      %1793 = vmatprep.subr.bf16.mxu0 0
      %1794 = vmatpush1.bf16.msra.mxu0 0
      %1795 = vmatprep.subr.bf16.mxu0 0
      %1796 = vmatpush1.bf16.msra.mxu0 0
      %1797 = vmatprep.subr.bf16.mxu0 0
      %1798 = vmatpush1.bf16.msra.mxu0 0
      %1799 = vmatprep.subr.bf16.mxu0 0
      %1800 = vmatpush1.bf16.msra.mxu0 0
      %1801 = vmatprep.subr.bf16.mxu0 0
      %1802 = vmatpush1.bf16.msra.mxu0 0
      %1803 = vmatprep.subr.bf16.mxu0 0
      %1804 = vmatpush1.bf16.msra.mxu0 0
      %1805 = vmatprep.subr.bf16.mxu0 0
      %1806 = vmatpush1.bf16.msra.mxu0 0
      %1807 = vmatprep.subr.bf16.mxu0 0
      %1808 = vmatpush1.bf16.msra.mxu0 0
      %1809 = vmatprep.subr.bf16.mxu0 0
      %1810 = vmatpush1.bf16.msra.mxu0 0
      %1811 = vmatprep.subr.bf16.mxu0 0
      %1812 = vmatpush1.bf16.msra.mxu0 0
      %1813 = vmatprep.subr.bf16.mxu0 0
      %1814 = vmatpush1.bf16.msra.mxu0 0
      %1815 = vmatprep.subr.bf16.mxu0 0
      %1816 = vmatpush1.bf16.msra.mxu0 0
      %1817 = vmatprep.mubr.bf16.mxu0 0
      %1818 = vmatmul.mubr.bf16.gmra.mrb[0].mxu0 %v1774
      %v1819 = vpop.f32.mrb[0].mxu0
      %v1820 = vadd.f32 0.0, %v1819
      %v1821 = vpop.f32.mrb[0].mxu0
      %v1822 = vadd.f32 0.0, %v1821
      %v1823 = vpop.f32.mrb[0].mxu0
      %v1824 = vpop.f32.mrb[0].mxu0
      %1825 = vdwg.mxu0
      %1826 = vmatprep.subr.bf16.mxu0 0
      %1827 = vmatpush1.bf16.msra.mxu0 %v1783
      %1828 = vmatprep.subr.bf16.mxu0 0
      %1829 = vmatpush1.bf16.msra.mxu0 0
      %1830 = vmatprep.subr.bf16.mxu0 0
      %1831 = vmatpush1.bf16.msra.mxu0 0
      %1832 = vmatprep.subr.bf16.mxu0 0
      %1833 = vmatpush1.bf16.msra.mxu0 0
      %1834 = vmatprep.subr.bf16.mxu0 0
      %1835 = vmatpush1.bf16.msra.mxu0 0
      %1836 = vmatprep.subr.bf16.mxu0 0
      %1837 = vmatpush1.bf16.msra.mxu0 0
      %1838 = vmatprep.subr.bf16.mxu0 0
      %1839 = vmatpush1.bf16.msra.mxu0 0
      %1840 = vmatprep.subr.bf16.mxu0 0
      %1841 = vmatpush1.bf16.msra.mxu0 0
      %1842 = vmatprep.subr.bf16.mxu0 0
      %1843 = vmatpush1.bf16.msra.mxu0 0
      %1844 = vmatprep.subr.bf16.mxu0 0
      %1845 = vmatpush1.bf16.msra.mxu0 0
      %1846 = vmatprep.subr.bf16.mxu0 0
      %1847 = vmatpush1.bf16.msra.mxu0 0
      %1848 = vmatprep.subr.bf16.mxu0 0
      %1849 = vmatpush1.bf16.msra.mxu0 0
      %1850 = vmatprep.subr.bf16.mxu0 0
      %1851 = vmatpush1.bf16.msra.mxu0 0
      %1852 = vmatprep.subr.bf16.mxu0 0
      %1853 = vmatpush1.bf16.msra.mxu0 0
      %1854 = vmatprep.subr.bf16.mxu0 0
      %1855 = vmatpush1.bf16.msra.mxu0 0
      %1856 = vmatprep.subr.bf16.mxu0 0
      %1857 = vmatpush1.bf16.msra.mxu0 0
      %1858 = vmatprep.mubr.bf16.mxu0 0
      %1859 = vmatmul.mubr.bf16.gmra.mrb[0].mxu0 %v1774
      %v1860 = vpop.f32.mrb[0].mxu0
      %v1861 = vadd.f32 0.0, %v1860
      %v1862 = vpop.f32.mrb[0].mxu0
      %v1863 = vpop.f32.mrb[0].mxu0
      %v1864 = vpop.f32.mrb[0].mxu0
      %1865 = vdwg.mxu0
      %v1866 = vadd.f32 %v1738, %v1820
      %v1867 = vadd.f32 %v1739, %v1822
      %v1868 = vadd.f32 %v1740, %v1861
      %s1869 = scalar_lea.vmem %s5, 8
      %v1870 = vld [vmem:[%s1869] sm:$0x3]
      %v1871 = vld [vmem:[#allocation2 + $0x2] sm:$0x3f]
      %v1873 = vcombine.high %v1871, %v1871
      %v1875 = vunpack.c.l.s4 1983009808
      %v1876 = vunpack.c.0.s8 %v1875
      %v1877 = vlaneseq
      %v1878 = vshrl.u32 %v1877, 7
      %v1879 = vsub.s32 %v1876, %v1878
      %v1880 = vrot.slane %v1871, %v1879
      %v1882 = vunpack.c.l.s4 1983009808
      %v1883 = vunpack.c.0.s8 %v1882
      %v1884 = vlaneseq
      %v1885 = vshrl.u32 %v1884, 7
      %v1886 = vsub.s32 %v1883, %v1885
      %v1887 = vrot.slane %v1873, %v1886
      %v1888 = vcombine.high %v1880, %v1880
      %v1890 = vsel %vm1414, %v1870, 0
      %v1893 = vsel %vm1418, %v1880, 0
      %v1896 = vsel %vm1418, %v1888, 0
      %v1899 = vsel %vm1418, %v1887, 0
      %1901 = vmatprep.subr.bf16.mxu0 %v1896
      %1902 = vmatpush1.bf16.msra.mxu0 %v1893
      %1903 = vmatprep.subr.bf16.mxu0 0
      %1904 = vmatpush1.bf16.msra.mxu0 0
      %1905 = vmatprep.subr.bf16.mxu0 0
      %1906 = vmatpush1.bf16.msra.mxu0 0
      %1907 = vmatprep.subr.bf16.mxu0 0
      %1908 = vmatpush1.bf16.msra.mxu0 0
      %1909 = vmatprep.subr.bf16.mxu0 0
      %1910 = vmatpush1.bf16.msra.mxu0 0
      %1911 = vmatprep.subr.bf16.mxu0 0
      %1912 = vmatpush1.bf16.msra.mxu0 0
      %1913 = vmatprep.subr.bf16.mxu0 0
      %1914 = vmatpush1.bf16.msra.mxu0 0
      %1915 = vmatprep.subr.bf16.mxu0 0
      %1916 = vmatpush1.bf16.msra.mxu0 0
      %1917 = vmatprep.subr.bf16.mxu0 0
      %1918 = vmatpush1.bf16.msra.mxu0 0
      %1919 = vmatprep.subr.bf16.mxu0 0
      %1920 = vmatpush1.bf16.msra.mxu0 0
      %1921 = vmatprep.subr.bf16.mxu0 0
      %1922 = vmatpush1.bf16.msra.mxu0 0
      %1923 = vmatprep.subr.bf16.mxu0 0
      %1924 = vmatpush1.bf16.msra.mxu0 0
      %1925 = vmatprep.subr.bf16.mxu0 0
      %1926 = vmatpush1.bf16.msra.mxu0 0
      %1927 = vmatprep.subr.bf16.mxu0 0
      %1928 = vmatpush1.bf16.msra.mxu0 0
      %1929 = vmatprep.subr.bf16.mxu0 0
      %1930 = vmatpush1.bf16.msra.mxu0 0
      %1931 = vmatprep.subr.bf16.mxu0 0
      %1932 = vmatpush1.bf16.msra.mxu0 0
      %1933 = vmatprep.mubr.bf16.mxu0 0
      %1934 = vmatmul.mubr.bf16.gmra.mrb[0].mxu0 %v1890
      %v1935 = vpop.f32.mrb[0].mxu0
      %v1936 = vadd.f32 0.0, %v1935
      %v1937 = vpop.f32.mrb[0].mxu0
      %v1938 = vadd.f32 0.0, %v1937
      %v1939 = vpop.f32.mrb[0].mxu0
      %v1940 = vpop.f32.mrb[0].mxu0
      %1941 = vdwg.mxu0
      %1942 = vmatprep.subr.bf16.mxu0 0
      %1943 = vmatpush1.bf16.msra.mxu0 %v1899
      %1944 = vmatprep.subr.bf16.mxu0 0
      %1945 = vmatpush1.bf16.msra.mxu0 0
      %1946 = vmatprep.subr.bf16.mxu0 0
      %1947 = vmatpush1.bf16.msra.mxu0 0
      %1948 = vmatprep.subr.bf16.mxu0 0
      %1949 = vmatpush1.bf16.msra.mxu0 0
      %1950 = vmatprep.subr.bf16.mxu0 0
      %1951 = vmatpush1.bf16.msra.mxu0 0
      %1952 = vmatprep.subr.bf16.mxu0 0
      %1953 = vmatpush1.bf16.msra.mxu0 0
      %1954 = vmatprep.subr.bf16.mxu0 0
      %1955 = vmatpush1.bf16.msra.mxu0 0
      %1956 = vmatprep.subr.bf16.mxu0 0
      %1957 = vmatpush1.bf16.msra.mxu0 0
      %1958 = vmatprep.subr.bf16.mxu0 0
      %1959 = vmatpush1.bf16.msra.mxu0 0
      %1960 = vmatprep.subr.bf16.mxu0 0
      %1961 = vmatpush1.bf16.msra.mxu0 0
      %1962 = vmatprep.subr.bf16.mxu0 0
      %1963 = vmatpush1.bf16.msra.mxu0 0
      %1964 = vmatprep.subr.bf16.mxu0 0
      %1965 = vmatpush1.bf16.msra.mxu0 0
      %1966 = vmatprep.subr.bf16.mxu0 0
      %1967 = vmatpush1.bf16.msra.mxu0 0
      %1968 = vmatprep.subr.bf16.mxu0 0
      %1969 = vmatpush1.bf16.msra.mxu0 0
      %1970 = vmatprep.subr.bf16.mxu0 0
      %1971 = vmatpush1.bf16.msra.mxu0 0
      %1972 = vmatprep.subr.bf16.mxu0 0
      %1973 = vmatpush1.bf16.msra.mxu0 0
      %1974 = vmatprep.mubr.bf16.mxu0 0
      %1975 = vmatmul.mubr.bf16.gmra.mrb[0].mxu0 %v1890
      %v1976 = vpop.f32.mrb[0].mxu0
      %v1977 = vadd.f32 0.0, %v1976
      %v1978 = vpop.f32.mrb[0].mxu0
      %v1979 = vpop.f32.mrb[0].mxu0
      %v1980 = vpop.f32.mrb[0].mxu0
      %1981 = vdwg.mxu0
      %v1982 = vadd.f32 %v1866, %v1936
      %v1983 = vadd.f32 %v1867, %v1938
      %v1984 = vadd.f32 %v1868, %v1977
      %s1985 = scalar_lea.vmem %s5, 10
      %v1986 = vld [vmem:[%s1985] sm:$0x3]
      %v1987 = vld [vmem:[#allocation2 + $0x2] sm:$0xff]
      %v1989 = vcombine.high %v1987, %v1987
      %v1991 = vunpack.c.l.s4 1983009808
      %v1992 = vunpack.c.0.s8 %v1991
      %v1993 = vlaneseq
      %v1994 = vshrl.u32 %v1993, 7
      %v1995 = vsub.s32 %v1992, %v1994
      %v1996 = vrot.slane %v1987, %v1995
      %v1998 = vunpack.c.l.s4 1983009808
      %v1999 = vunpack.c.0.s8 %v1998
      %v2000 = vlaneseq
      %v2001 = vshrl.u32 %v2000, 7
      %v2002 = vsub.s32 %v1999, %v2001
      %v2003 = vrot.slane %v1989, %v2002
      %v2004 = vcombine.high %v1996, %v1996
      %v2005 = vcombine.high %v2003, %v2003
      %2006 = vrot.lane.b32.xlu0 %v1996, 127
      %v2007 = vpop.permute.xlu0 %2006
      %2008 = vrot.lane.b32.xlu0 %v2004, 127
      %v2009 = vpop.permute.xlu0 %2008
      %2010 = vrot.lane.b32.xlu0 %v2003, 127
      %v2011 = vpop.permute.xlu0 %2010
      %2012 = vrot.lane.b32.xlu0 %v2005, 127
      %v2013 = vpop.permute.xlu0 %2012
      %v2014 = vsel %vm884, %v2007, %v2009
      %v2015 = vsel %vm884, %v2009, %v2011
      %v2016 = vsel %vm884, %v2011, %v2013
      %v2018 = vsel %vm1414, %v1986, 0
      %v2021 = vsel %vm1418, %v2014, 0
      %v2024 = vsel %vm1418, %v2015, 0
      %v2027 = vsel %vm1418, %v2016, 0
      %2029 = vmatprep.subr.bf16.mxu0 %v2024
      %2030 = vmatpush1.bf16.msra.mxu0 %v2021
      %2031 = vmatprep.subr.bf16.mxu0 0
      %2032 = vmatpush1.bf16.msra.mxu0 0
      %2033 = vmatprep.subr.bf16.mxu0 0
      %2034 = vmatpush1.bf16.msra.mxu0 0
      %2035 = vmatprep.subr.bf16.mxu0 0
      %2036 = vmatpush1.bf16.msra.mxu0 0
      %2037 = vmatprep.subr.bf16.mxu0 0
      %2038 = vmatpush1.bf16.msra.mxu0 0
      %2039 = vmatprep.subr.bf16.mxu0 0
      %2040 = vmatpush1.bf16.msra.mxu0 0
      %2041 = vmatprep.subr.bf16.mxu0 0
      %2042 = vmatpush1.bf16.msra.mxu0 0
      %2043 = vmatprep.subr.bf16.mxu0 0
      %2044 = vmatpush1.bf16.msra.mxu0 0
      %2045 = vmatprep.subr.bf16.mxu0 0
      %2046 = vmatpush1.bf16.msra.mxu0 0
      %2047 = vmatprep.subr.bf16.mxu0 0
      %2048 = vmatpush1.bf16.msra.mxu0 0
      %2049 = vmatprep.subr.bf16.mxu0 0
      %2050 = vmatpush1.bf16.msra.mxu0 0
      %2051 = vmatprep.subr.bf16.mxu0 0
      %2052 = vmatpush1.bf16.msra.mxu0 0
      %2053 = vmatprep.subr.bf16.mxu0 0
      %2054 = vmatpush1.bf16.msra.mxu0 0
      %2055 = vmatprep.subr.bf16.mxu0 0
      %2056 = vmatpush1.bf16.msra.mxu0 0
      %2057 = vmatprep.subr.bf16.mxu0 0
      %2058 = vmatpush1.bf16.msra.mxu0 0
      %2059 = vmatprep.subr.bf16.mxu0 0
      %2060 = vmatpush1.bf16.msra.mxu0 0
      %2061 = vmatprep.mubr.bf16.mxu0 0
      %2062 = vmatmul.mubr.bf16.gmra.mrb[0].mxu0 %v2018
      %v2063 = vpop.f32.mrb[0].mxu0
      %v2064 = vadd.f32 0.0, %v2063
      %v2065 = vpop.f32.mrb[0].mxu0
      %v2066 = vadd.f32 0.0, %v2065
      %v2067 = vpop.f32.mrb[0].mxu0
      %v2068 = vpop.f32.mrb[0].mxu0
      %2069 = vdwg.mxu0
      %2070 = vmatprep.subr.bf16.mxu0 0
      %2071 = vmatpush1.bf16.msra.mxu0 %v2027
      %2072 = vmatprep.subr.bf16.mxu0 0
      %2073 = vmatpush1.bf16.msra.mxu0 0
      %2074 = vmatprep.subr.bf16.mxu0 0
      %2075 = vmatpush1.bf16.msra.mxu0 0
      %2076 = vmatprep.subr.bf16.mxu0 0
      %2077 = vmatpush1.bf16.msra.mxu0 0
      %2078 = vmatprep.subr.bf16.mxu0 0
      %2079 = vmatpush1.bf16.msra.mxu0 0
      %2080 = vmatprep.subr.bf16.mxu0 0
      %2081 = vmatpush1.bf16.msra.mxu0 0
      %2082 = vmatprep.subr.bf16.mxu0 0
      %2083 = vmatpush1.bf16.msra.mxu0 0
      %2084 = vmatprep.subr.bf16.mxu0 0
      %2085 = vmatpush1.bf16.msra.mxu0 0
      %2086 = vmatprep.subr.bf16.mxu0 0
      %2087 = vmatpush1.bf16.msra.mxu0 0
      %2088 = vmatprep.subr.bf16.mxu0 0
      %2089 = vmatpush1.bf16.msra.mxu0 0
      %2090 = vmatprep.subr.bf16.mxu0 0
      %2091 = vmatpush1.bf16.msra.mxu0 0
      %2092 = vmatprep.subr.bf16.mxu0 0
      %2093 = vmatpush1.bf16.msra.mxu0 0
      %2094 = vmatprep.subr.bf16.mxu0 0
      %2095 = vmatpush1.bf16.msra.mxu0 0
      %2096 = vmatprep.subr.bf16.mxu0 0
      %2097 = vmatpush1.bf16.msra.mxu0 0
      %2098 = vmatprep.subr.bf16.mxu0 0
      %2099 = vmatpush1.bf16.msra.mxu0 0
      %2100 = vmatprep.subr.bf16.mxu0 0
      %2101 = vmatpush1.bf16.msra.mxu0 0
      %2102 = vmatprep.mubr.bf16.mxu0 0
      %2103 = vmatmul.mubr.bf16.gmra.mrb[0].mxu0 %v2018
      %v2104 = vpop.f32.mrb[0].mxu0
      %v2105 = vadd.f32 0.0, %v2104
      %v2106 = vpop.f32.mrb[0].mxu0
      %v2107 = vpop.f32.mrb[0].mxu0
      %v2108 = vpop.f32.mrb[0].mxu0
      %2109 = vdwg.mxu0
      %v2110 = vadd.f32 %v1982, %v2064
      %v2111 = vadd.f32 %v1983, %v2066
      %v2112 = vadd.f32 %v1984, %v2105
      %s2113 = scalar_lea.vmem %s5, 12
      %v2114 = vld [vmem:[%s2113] sm:$0x3]
      %v2115 = vld [vmem:[#allocation2 + $0x2] sm:$0xff]
      %v2117 = vcombine.high %v2115, %v2115
      %v2119 = vunpack.c.l.s4 1983009808
      %v2120 = vunpack.c.0.s8 %v2119
      %v2121 = vlaneseq
      %v2122 = vshrl.u32 %v2121, 7
      %v2123 = vsub.s32 %v2120, %v2122
      %v2124 = vrot.slane %v2115, %v2123
      %v2126 = vunpack.c.l.s4 1983009808
      %v2127 = vunpack.c.0.s8 %v2126
      %v2128 = vlaneseq
      %v2129 = vshrl.u32 %v2128, 7
      %v2130 = vsub.s32 %v2127, %v2129
      %v2131 = vrot.slane %v2117, %v2130
      %v2132 = vcombine.high %v2124, %v2124
      %v2133 = vcombine.high %v2131, %v2131
      %2134 = vrot.lane.b32.xlu0 %v2124, 111
      %v2135 = vpop.permute.xlu0 %2134
      %2136 = vrot.lane.b32.xlu0 %v2132, 111
      %v2137 = vpop.permute.xlu0 %2136
      %2138 = vrot.lane.b32.xlu0 %v2131, 111
      %v2139 = vpop.permute.xlu0 %2138
      %2140 = vrot.lane.b32.xlu0 %v2133, 111
      %v2141 = vpop.permute.xlu0 %2140
      %v2142 = vsel %vm994, %v2135, %v2137
      %v2143 = vsel %vm994, %v2137, %v2139
      %v2144 = vsel %vm994, %v2139, %v2141
      %v2146 = vsel %vm1414, %v2114, 0
      %v2149 = vsel %vm1418, %v2142, 0
      %v2152 = vsel %vm1418, %v2143, 0
      %v2155 = vsel %vm1418, %v2144, 0
      %2157 = vmatprep.subr.bf16.mxu0 %v2152
      %2158 = vmatpush1.bf16.msra.mxu0 %v2149
      %2159 = vmatprep.subr.bf16.mxu0 0
      %2160 = vmatpush1.bf16.msra.mxu0 0
      %2161 = vmatprep.subr.bf16.mxu0 0
      %2162 = vmatpush1.bf16.msra.mxu0 0
      %2163 = vmatprep.subr.bf16.mxu0 0
      %2164 = vmatpush1.bf16.msra.mxu0 0
      %2165 = vmatprep.subr.bf16.mxu0 0
      %2166 = vmatpush1.bf16.msra.mxu0 0
      %2167 = vmatprep.subr.bf16.mxu0 0
      %2168 = vmatpush1.bf16.msra.mxu0 0
      %2169 = vmatprep.subr.bf16.mxu0 0
      %2170 = vmatpush1.bf16.msra.mxu0 0
      %2171 = vmatprep.subr.bf16.mxu0 0
      %2172 = vmatpush1.bf16.msra.mxu0 0
      %2173 = vmatprep.subr.bf16.mxu0 0
      %2174 = vmatpush1.bf16.msra.mxu0 0
      %2175 = vmatprep.subr.bf16.mxu0 0
      %2176 = vmatpush1.bf16.msra.mxu0 0
      %2177 = vmatprep.subr.bf16.mxu0 0
      %2178 = vmatpush1.bf16.msra.mxu0 0
      %2179 = vmatprep.subr.bf16.mxu0 0
      %2180 = vmatpush1.bf16.msra.mxu0 0
      %2181 = vmatprep.subr.bf16.mxu0 0
      %2182 = vmatpush1.bf16.msra.mxu0 0
      %2183 = vmatprep.subr.bf16.mxu0 0
      %2184 = vmatpush1.bf16.msra.mxu0 0
      %2185 = vmatprep.subr.bf16.mxu0 0
      %2186 = vmatpush1.bf16.msra.mxu0 0
      %2187 = vmatprep.subr.bf16.mxu0 0
      %2188 = vmatpush1.bf16.msra.mxu0 0
      %2189 = vmatprep.mubr.bf16.mxu0 0
      %2190 = vmatmul.mubr.bf16.gmra.mrb[0].mxu0 %v2146
      %v2191 = vpop.f32.mrb[0].mxu0
      %v2192 = vadd.f32 0.0, %v2191
      %v2193 = vpop.f32.mrb[0].mxu0
      %v2194 = vadd.f32 0.0, %v2193
      %v2195 = vpop.f32.mrb[0].mxu0
      %v2196 = vpop.f32.mrb[0].mxu0
      %2197 = vdwg.mxu0
      %2198 = vmatprep.subr.bf16.mxu0 0
      %2199 = vmatpush1.bf16.msra.mxu0 %v2155
      %2200 = vmatprep.subr.bf16.mxu0 0
      %2201 = vmatpush1.bf16.msra.mxu0 0
      %2202 = vmatprep.subr.bf16.mxu0 0
      %2203 = vmatpush1.bf16.msra.mxu0 0
      %2204 = vmatprep.subr.bf16.mxu0 0
      %2205 = vmatpush1.bf16.msra.mxu0 0
      %2206 = vmatprep.subr.bf16.mxu0 0
      %2207 = vmatpush1.bf16.msra.mxu0 0
      %2208 = vmatprep.subr.bf16.mxu0 0
      %2209 = vmatpush1.bf16.msra.mxu0 0
      %2210 = vmatprep.subr.bf16.mxu0 0
      %2211 = vmatpush1.bf16.msra.mxu0 0
      %2212 = vmatprep.subr.bf16.mxu0 0
      %2213 = vmatpush1.bf16.msra.mxu0 0
      %2214 = vmatprep.subr.bf16.mxu0 0
      %2215 = vmatpush1.bf16.msra.mxu0 0
      %2216 = vmatprep.subr.bf16.mxu0 0
      %2217 = vmatpush1.bf16.msra.mxu0 0
      %2218 = vmatprep.subr.bf16.mxu0 0
      %2219 = vmatpush1.bf16.msra.mxu0 0
      %2220 = vmatprep.subr.bf16.mxu0 0
      %2221 = vmatpush1.bf16.msra.mxu0 0
      %2222 = vmatprep.subr.bf16.mxu0 0
      %2223 = vmatpush1.bf16.msra.mxu0 0
      %2224 = vmatprep.subr.bf16.mxu0 0
      %2225 = vmatpush1.bf16.msra.mxu0 0
      %2226 = vmatprep.subr.bf16.mxu0 0
      %2227 = vmatpush1.bf16.msra.mxu0 0
      %2228 = vmatprep.subr.bf16.mxu0 0
      %2229 = vmatpush1.bf16.msra.mxu0 0
      %2230 = vmatprep.mubr.bf16.mxu0 0
      %2231 = vmatmul.mubr.bf16.gmra.mrb[0].mxu0 %v2146
      %v2232 = vpop.f32.mrb[0].mxu0
      %v2233 = vadd.f32 0.0, %v2232
      %v2234 = vpop.f32.mrb[0].mxu0
      %v2235 = vpop.f32.mrb[0].mxu0
      %v2236 = vpop.f32.mrb[0].mxu0
      %2237 = vdwg.mxu0
      %v2238 = vadd.f32 %v2110, %v2192
      %v2239 = vadd.f32 %v2111, %v2194
      %v2240 = vadd.f32 %v2112, %v2233
      %s2241 = scalar_lea.vmem %s5, 14
      %v2242 = vld [vmem:[%s2241] sm:$0x3]
      %v2243 = vld [vmem:[#allocation2 + $0x2] sm:$0xff]
      %v2245 = vcombine.high %v2243, %v2243
      %v2247 = vunpack.c.l.s4 1983009808
      %v2248 = vunpack.c.0.s8 %v2247
      %v2249 = vlaneseq
      %v2250 = vshrl.u32 %v2249, 7
      %v2251 = vsub.s32 %v2248, %v2250
      %v2252 = vrot.slane %v2243, %v2251
      %v2254 = vunpack.c.l.s4 1983009808
      %v2255 = vunpack.c.0.s8 %v2254
      %v2256 = vlaneseq
      %v2257 = vshrl.u32 %v2256, 7
      %v2258 = vsub.s32 %v2255, %v2257
      %v2259 = vrot.slane %v2245, %v2258
      %v2260 = vcombine.high %v2252, %v2252
      %v2261 = vcombine.high %v2259, %v2259
      %2262 = vrot.lane.b32.xlu0 %v2252, 110
      %v2263 = vpop.permute.xlu0 %2262
      %2264 = vrot.lane.b32.xlu0 %v2260, 110
      %v2265 = vpop.permute.xlu0 %2264
      %2266 = vrot.lane.b32.xlu0 %v2259, 110
      %v2267 = vpop.permute.xlu0 %2266
      %2268 = vrot.lane.b32.xlu0 %v2261, 110
      %v2269 = vpop.permute.xlu0 %2268
      %v2270 = vsel %vm1104, %v2263, %v2265
      %v2271 = vsel %vm1104, %v2265, %v2267
      %v2272 = vsel %vm1104, %v2267, %v2269
      %v2274 = vsel %vm1414, %v2242, 0
      %v2277 = vsel %vm1418, %v2270, 0
      %v2280 = vsel %vm1418, %v2271, 0
      %v2283 = vsel %vm1418, %v2272, 0
      %2285 = vmatprep.subr.bf16.mxu0 %v2280
      %2286 = vmatpush1.bf16.msra.mxu0 %v2277
      %2287 = vmatprep.subr.bf16.mxu0 0
      %2288 = vmatpush1.bf16.msra.mxu0 0
      %2289 = vmatprep.subr.bf16.mxu0 0
      %2290 = vmatpush1.bf16.msra.mxu0 0
      %2291 = vmatprep.subr.bf16.mxu0 0
      %2292 = vmatpush1.bf16.msra.mxu0 0
      %2293 = vmatprep.subr.bf16.mxu0 0
      %2294 = vmatpush1.bf16.msra.mxu0 0
      %2295 = vmatprep.subr.bf16.mxu0 0
      %2296 = vmatpush1.bf16.msra.mxu0 0
      %2297 = vmatprep.subr.bf16.mxu0 0
      %2298 = vmatpush1.bf16.msra.mxu0 0
      %2299 = vmatprep.subr.bf16.mxu0 0
      %2300 = vmatpush1.bf16.msra.mxu0 0
      %2301 = vmatprep.subr.bf16.mxu0 0
      %2302 = vmatpush1.bf16.msra.mxu0 0
      %2303 = vmatprep.subr.bf16.mxu0 0
      %2304 = vmatpush1.bf16.msra.mxu0 0
      %2305 = vmatprep.subr.bf16.mxu0 0
      %2306 = vmatpush1.bf16.msra.mxu0 0
      %2307 = vmatprep.subr.bf16.mxu0 0
      %2308 = vmatpush1.bf16.msra.mxu0 0
      %2309 = vmatprep.subr.bf16.mxu0 0
      %2310 = vmatpush1.bf16.msra.mxu0 0
      %2311 = vmatprep.subr.bf16.mxu0 0
      %2312 = vmatpush1.bf16.msra.mxu0 0
      %2313 = vmatprep.subr.bf16.mxu0 0
      %2314 = vmatpush1.bf16.msra.mxu0 0
      %2315 = vmatprep.subr.bf16.mxu0 0
      %2316 = vmatpush1.bf16.msra.mxu0 0
      %2317 = vmatprep.mubr.bf16.mxu0 0
      %2318 = vmatmul.mubr.bf16.gmra.mrb[0].mxu0 %v2274
      %v2319 = vpop.f32.mrb[0].mxu0
      %v2320 = vadd.f32 0.0, %v2319
      %v2321 = vpop.f32.mrb[0].mxu0
      %v2322 = vadd.f32 0.0, %v2321
      %v2323 = vpop.f32.mrb[0].mxu0
      %v2324 = vpop.f32.mrb[0].mxu0
      %2325 = vdwg.mxu0
      %2326 = vmatprep.subr.bf16.mxu0 0
      %2327 = vmatpush1.bf16.msra.mxu0 %v2283
      %2328 = vmatprep.subr.bf16.mxu0 0
      %2329 = vmatpush1.bf16.msra.mxu0 0
      %2330 = vmatprep.subr.bf16.mxu0 0
      %2331 = vmatpush1.bf16.msra.mxu0 0
      %2332 = vmatprep.subr.bf16.mxu0 0
      %2333 = vmatpush1.bf16.msra.mxu0 0
      %2334 = vmatprep.subr.bf16.mxu0 0
      %2335 = vmatpush1.bf16.msra.mxu0 0
      %2336 = vmatprep.subr.bf16.mxu0 0
      %2337 = vmatpush1.bf16.msra.mxu0 0
      %2338 = vmatprep.subr.bf16.mxu0 0
      %2339 = vmatpush1.bf16.msra.mxu0 0
      %2340 = vmatprep.subr.bf16.mxu0 0
      %2341 = vmatpush1.bf16.msra.mxu0 0
      %2342 = vmatprep.subr.bf16.mxu0 0
      %2343 = vmatpush1.bf16.msra.mxu0 0
      %2344 = vmatprep.subr.bf16.mxu0 0
      %2345 = vmatpush1.bf16.msra.mxu0 0
      %2346 = vmatprep.subr.bf16.mxu0 0
      %2347 = vmatpush1.bf16.msra.mxu0 0
      %2348 = vmatprep.subr.bf16.mxu0 0
      %2349 = vmatpush1.bf16.msra.mxu0 0
      %2350 = vmatprep.subr.bf16.mxu0 0
      %2351 = vmatpush1.bf16.msra.mxu0 0
      %2352 = vmatprep.subr.bf16.mxu0 0
      %2353 = vmatpush1.bf16.msra.mxu0 0
      %2354 = vmatprep.subr.bf16.mxu0 0
      %2355 = vmatpush1.bf16.msra.mxu0 0
      %2356 = vmatprep.subr.bf16.mxu0 0
      %2357 = vmatpush1.bf16.msra.mxu0 0
      %2358 = vmatprep.mubr.bf16.mxu0 0
      %2359 = vmatmul.mubr.bf16.gmra.mrb[0].mxu0 %v2274
      %v2360 = vpop.f32.mrb[0].mxu0
      %v2361 = vadd.f32 0.0, %v2360
      %v2362 = vpop.f32.mrb[0].mxu0
      %v2363 = vpop.f32.mrb[0].mxu0
      %v2364 = vpop.f32.mrb[0].mxu0
      %2365 = vdwg.mxu0
      %v2366 = vadd.f32 %v2238, %v2320
      %v2367 = vadd.f32 %v2239, %v2322
      %v2368 = vadd.f32 %v2240, %v2361
      %s2369 = scalar_lea.vmem %s5, 16
      %v2370 = vld [vmem:[%s2369] sm:$0x3]
      %v2371 = vld [vmem:[#allocation2 + $0x2] sm:$0xff]
      %v2373 = vcombine.high %v2371, %v2371
      %v2375 = vunpack.c.l.s4 1983009808
      %v2376 = vunpack.c.0.s8 %v2375
      %v2377 = vlaneseq
      %v2378 = vshrl.u32 %v2377, 7
      %v2379 = vsub.s32 %v2376, %v2378
      %v2380 = vrot.slane %v2371, %v2379
      %v2382 = vunpack.c.l.s4 1983009808
      %v2383 = vunpack.c.0.s8 %v2382
      %v2384 = vlaneseq
      %v2385 = vshrl.u32 %v2384, 7
      %v2386 = vsub.s32 %v2383, %v2385
      %v2387 = vrot.slane %v2373, %v2386
      %v2388 = vcombine.high %v2380, %v2380
      %v2389 = vcombine.high %v2387, %v2387
      %2390 = vrot.lane.b32.xlu0 %v2380, 109
      %v2391 = vpop.permute.xlu0 %2390
      %2392 = vrot.lane.b32.xlu0 %v2388, 109
      %v2393 = vpop.permute.xlu0 %2392
      %2394 = vrot.lane.b32.xlu0 %v2387, 109
      %v2395 = vpop.permute.xlu0 %2394
      %2396 = vrot.lane.b32.xlu0 %v2389, 109
      %v2397 = vpop.permute.xlu0 %2396
      %v2398 = vsel %vm1214, %v2391, %v2393
      %v2399 = vsel %vm1214, %v2393, %v2395
      %v2400 = vsel %vm1214, %v2395, %v2397
      %v2402 = vsel %vm1414, %v2370, 0
      %v2405 = vsel %vm1418, %v2398, 0
      %v2408 = vsel %vm1418, %v2399, 0
      %v2411 = vsel %vm1418, %v2400, 0
      %2413 = vmatprep.subr.bf16.mxu0 %v2408
      %2414 = vmatpush1.bf16.msra.mxu0 %v2405
      %2415 = vmatprep.subr.bf16.mxu0 0
      %2416 = vmatpush1.bf16.msra.mxu0 0
      %2417 = vmatprep.subr.bf16.mxu0 0
      %2418 = vmatpush1.bf16.msra.mxu0 0
      %2419 = vmatprep.subr.bf16.mxu0 0
      %2420 = vmatpush1.bf16.msra.mxu0 0
      %2421 = vmatprep.subr.bf16.mxu0 0
      %2422 = vmatpush1.bf16.msra.mxu0 0
      %2423 = vmatprep.subr.bf16.mxu0 0
      %2424 = vmatpush1.bf16.msra.mxu0 0
      %2425 = vmatprep.subr.bf16.mxu0 0
      %2426 = vmatpush1.bf16.msra.mxu0 0
      %2427 = vmatprep.subr.bf16.mxu0 0
      %2428 = vmatpush1.bf16.msra.mxu0 0
      %2429 = vmatprep.subr.bf16.mxu0 0
      %2430 = vmatpush1.bf16.msra.mxu0 0
      %2431 = vmatprep.subr.bf16.mxu0 0
      %2432 = vmatpush1.bf16.msra.mxu0 0
      %2433 = vmatprep.subr.bf16.mxu0 0
      %2434 = vmatpush1.bf16.msra.mxu0 0
      %2435 = vmatprep.subr.bf16.mxu0 0
      %2436 = vmatpush1.bf16.msra.mxu0 0
      %2437 = vmatprep.subr.bf16.mxu0 0
      %2438 = vmatpush1.bf16.msra.mxu0 0
      %2439 = vmatprep.subr.bf16.mxu0 0
      %2440 = vmatpush1.bf16.msra.mxu0 0
      %2441 = vmatprep.subr.bf16.mxu0 0
      %2442 = vmatpush1.bf16.msra.mxu0 0
      %2443 = vmatprep.subr.bf16.mxu0 0
      %2444 = vmatpush1.bf16.msra.mxu0 0
      %2445 = vmatprep.mubr.bf16.mxu0 0
      %2446 = vmatmul.mubr.bf16.gmra.mrb[0].mxu0 %v2402
      %v2447 = vpop.f32.mrb[0].mxu0
      %v2448 = vadd.f32 0.0, %v2447
      %v2449 = vpop.f32.mrb[0].mxu0
      %v2450 = vadd.f32 0.0, %v2449
      %v2451 = vpop.f32.mrb[0].mxu0
      %v2452 = vpop.f32.mrb[0].mxu0
      %2453 = vdwg.mxu0
      %2454 = vmatprep.subr.bf16.mxu0 0
      %2455 = vmatpush1.bf16.msra.mxu0 %v2411
      %2456 = vmatprep.subr.bf16.mxu0 0
      %2457 = vmatpush1.bf16.msra.mxu0 0
      %2458 = vmatprep.subr.bf16.mxu0 0
      %2459 = vmatpush1.bf16.msra.mxu0 0
      %2460 = vmatprep.subr.bf16.mxu0 0
      %2461 = vmatpush1.bf16.msra.mxu0 0
      %2462 = vmatprep.subr.bf16.mxu0 0
      %2463 = vmatpush1.bf16.msra.mxu0 0
      %2464 = vmatprep.subr.bf16.mxu0 0
      %2465 = vmatpush1.bf16.msra.mxu0 0
      %2466 = vmatprep.subr.bf16.mxu0 0
      %2467 = vmatpush1.bf16.msra.mxu0 0
      %2468 = vmatprep.subr.bf16.mxu0 0
      %2469 = vmatpush1.bf16.msra.mxu0 0
      %2470 = vmatprep.subr.bf16.mxu0 0
      %2471 = vmatpush1.bf16.msra.mxu0 0
      %2472 = vmatprep.subr.bf16.mxu0 0
      %2473 = vmatpush1.bf16.msra.mxu0 0
      %2474 = vmatprep.subr.bf16.mxu0 0
      %2475 = vmatpush1.bf16.msra.mxu0 0
      %2476 = vmatprep.subr.bf16.mxu0 0
      %2477 = vmatpush1.bf16.msra.mxu0 0
      %2478 = vmatprep.subr.bf16.mxu0 0
      %2479 = vmatpush1.bf16.msra.mxu0 0
      %2480 = vmatprep.subr.bf16.mxu0 0
      %2481 = vmatpush1.bf16.msra.mxu0 0
      %2482 = vmatprep.subr.bf16.mxu0 0
      %2483 = vmatpush1.bf16.msra.mxu0 0
      %2484 = vmatprep.subr.bf16.mxu0 0
      %2485 = vmatpush1.bf16.msra.mxu0 0
      %2486 = vmatprep.mubr.bf16.mxu0 0
      %2487 = vmatmul.mubr.bf16.gmra.mrb[0].mxu0 %v2402
      %v2488 = vpop.f32.mrb[0].mxu0
      %v2489 = vadd.f32 0.0, %v2488
      %v2490 = vpop.f32.mrb[0].mxu0
      %v2491 = vpop.f32.mrb[0].mxu0
      %v2492 = vpop.f32.mrb[0].mxu0
      %2493 = vdwg.mxu0
      %v2494 = vadd.f32 %v2366, %v2448
      %v2495 = vadd.f32 %v2367, %v2450
      %v2496 = vadd.f32 %v2368, %v2489
      %v2497 = vld [vmem:[%s6] sm:$0xf]
      %2499 = vset.pattern.permute.xlu0 0
      %2500 = vperm.xlu0 %2499, %v2497
      %v2501 = vpop.permute.xlu0 %2500
      %v2503 = vmul.f32 %v2494, %v2501
      %v2504 = vmul.f32 %v2495, %v2501
      %v2505 = vmul.f32 %v2496, %v2501
      %v2506 = vld [vmem:[%s7] sm:$0xf]
      %2508 = vset.pattern.permute.xlu0 0
      %2509 = vperm.xlu0 %2508, %v2506
      %v2510 = vpop.permute.xlu0 %2509
      %v2512 = vadd.f32 %v2503, %v2510
      %v2513 = vadd.f32 %v2504, %v2510
      %v2514 = vadd.f32 %v2505, %v2510
      %v2515 = vmax.f32 %v2512, 0.0
      %v2516 = vmax.f32 %v2513, 0.0
      %v2517 = vmax.f32 %v2514, 0.0
      %v2520 = vcombine.low %v2515, %v2516
      %2522 = vst [vmem:[%s305] sm:$0xff] %v2520
      %2523 = vst [vmem:[%s305 + $0x8] sm:$0xf] %v2517
      %p2524 = scmp.lt.s32.totalorder %s19, 1
      %s2525 = scalar_select %p2524, %s19, 1
      %s2526 = smul.addr %s2525, 3
      %s2527 = smul.addr %s2526, 4
      %s2528 = scalar_lea.vmem %s8, %s2527
      // Predicated region
      $region53: #{up_forward.1} parent=51 // pred_check
        %p2529 = pneg %p210
      $region54: #{up_forward.1} parent=51 // pred_check_branch
        %2531 = sbr.rel (%p2529) target = $region56
      $region55: #{up_forward.1} parent=51 // pred_region
        _
      $region56: #{up_forward.1} parent=51 // pred_fallthru
        _
    $region52: #{up_forward.1} parent=5 // pred_fallthru
      _
    %p2532 = scmp.le.s32.totalorder 2, %s14
    // Predicated region
    $region57: #{up_forward.1} parent=5 // pred_check
      %p2533 = pneg %p2532
    $region58: #{up_forward.1} parent=5 // pred_check_branch
      %2535 = sbr.rel (%p2533) target = $region60
    $region59: #{up_forward.1} parent=5 // pred_region
      %s2536 = ssub.s32 %s14, 2
      // Predicated region
      $region61: #{up_forward.1} parent=59 // pred_check
        %p2537 = pneg %p216
      $region62: #{up_forward.1} parent=59 // pred_check_branch
        %2539 = sbr.rel (%p2537) target = $region64
      $region63: #{up_forward.1} parent=59 // pred_region
        %p2540 = scmp.lt.s32.totalorder %s20, 1
        %s2541 = scalar_select %p2540, %s20, 1
        %s2542 = smul.addr %s2541, 3
        %s2543 = smul.addr %s2542, 4
        %s2544 = scalar_lea.vmem %s8, %s2543
      $region64: #{up_forward.1} parent=59 // pred_fallthru
        _
    $region60: #{up_forward.1} parent=5 // pred_fallthru
      _
  $region6: #{up_forward.1} parent=0 // loop_footer
    %s18 = sadd.s32 1, %s14
  $region7: #{up_forward.1} parent=0 // loop_footer_branch
    %13 = sbr.rel target = $region3
  $region8: #{up_forward.1} parent=0 // loop_exit
    _

</llo_original>
